<compile_context>
chip_gen: v7x
topology: tpu7x:2x2x1
jax: 0.10.0
libtpu: 0.0.40
codegen_flags: <defaults>
</compile_context>

<pallas_src>
from functools import partial

import numpy as np
import jax
import jax.numpy as jnp
from jax import lax
from jax.experimental import pallas as pl
from jax.experimental.pallas import tpu as pltpu

# ----------------------------------------------------------------------------
# Fixed geometric constants of the PointcloudToVoxels stage (synthetic).
# ----------------------------------------------------------------------------
VOXEL_ORIGIN = (-2.0, -2.0, -0.5)   # world coordinate of voxel (0,0,0) corner
VOXEL_RES = 0.5                     # meters per voxel
VOXEL_DIMS = (8, 8, 4)              # (X, Y, Z) voxel counts


def _round_up(a, m):
    return -(-a // m) * m


def _build_rays(H, W, hfov_deg):
    """Pinhole camera rays (camera frame, z forward), shape (3, H*W)."""
    f = (W / 2.0) / jnp.tan(jnp.deg2rad(jnp.float32(hfov_deg)) / 2.0)
    cx = (W - 1) / 2.0
    cy = (H - 1) / 2.0
    u = jnp.arange(W, dtype=jnp.float32)
    v = jnp.arange(H, dtype=jnp.float32)
    vv, uu = jnp.meshgrid(v, u, indexing="ij")
    return jnp.stack([(uu - cx) / f, (vv - cy) / f, jnp.ones_like(uu)],
                     axis=0).reshape(3, H * W)


def _invert_extrinsics(ext_b44):
    """Closed-form rigid inverse of a (B, 4, 4) world->camera transform."""
    R = ext_b44[:, :3, :3]
    t = ext_b44[:, :3, 3:4]
    Rt = jnp.swapaxes(R, 1, 2)
    tinv = -jnp.matmul(Rt, t)
    top = jnp.concatenate([Rt, tinv], axis=2)                       # (B, 3, 4)
    bot = jnp.broadcast_to(jnp.array([0.0, 0.0, 0.0, 1.0], jnp.float32)[None, None, :],
                           (ext_b44.shape[0], 1, 4))
    return jnp.concatenate([top, bot], axis=1)                      # (B, 4, 4)


# ----------------------------------------------------------------------------
# Pallas kernel.  grid = (B, core_split, N-tile).  Outputs raw per-(b, core)
# feature sums (V, C) and counts (V, 1), accumulated across the N-tile axis.
# ----------------------------------------------------------------------------
def _image_to_voxels_kernel(rays_ref, depth_ref, scene_ref, invext_ref,
                            fsum_ref, cnt_ref, *, C, X, Y, Z, origin, res, chunk):
    b = pl.program_id(0)
    n = pl.program_id(2)
    V = X * Y * Z
    nt = rays_ref.shape[1]
    n_chunks = nt // chunk

    @pl.when(n == 0)
    def _():
        fsum_ref[...] = jnp.zeros_like(fsum_ref)
        cnt_ref[...] = jnp.zeros_like(cnt_ref)

    # camera->world rows as scalars from the flat (B*16,) SMEM table.
    base = 16 * b
    m = [[invext_ref[base + 4 * i + j] for j in range(4)] for i in range(3)]
    inv_res = 1.0 / res

    def chunk_body(ci, carry):
        s = pl.multiple_of(ci * chunk, chunk)

        # ---- ImageToPointcloud: unproject rays * depth, transform to world ----
        d = depth_ref[:, pl.ds(s, chunk)]                     # (1, Ksub) f32
        rx = rays_ref[0:1, pl.ds(s, chunk)]
        ry = rays_ref[1:2, pl.ds(s, chunk)]
        rz = rays_ref[2:3, pl.ds(s, chunk)]
        xc = rx * d
        yc = ry * d
        zc = rz * d
        xw = m[0][0] * xc + m[0][1] * yc + m[0][2] * zc + m[0][3]
        yw = m[1][0] * xc + m[1][1] * yc + m[1][2] * zc + m[1][3]
        zw = m[2][0] * xc + m[2][1] * yc + m[2][2] * zc + m[2][3]

        # ---- PointcloudToVoxels: voxel indices + validity ---------------------
        vx = jnp.floor((xw - origin[0]) * inv_res).astype(jnp.int32)
        vy = jnp.floor((yw - origin[1]) * inv_res).astype(jnp.int32)
        vz = jnp.floor((zw - origin[2]) * inv_res).astype(jnp.int32)
        valid = ((d > 0.0)
                 & (vx >= 0) & (vx < X)
                 & (vy >= 0) & (vy < Y)
                 & (vz >= 0) & (vz < Z))
        flat = jnp.where(valid, vx * (Y * Z) + vy * Z + vz, -1)   # (1, Ksub) i32

        # ---- scatter-add via bf16 one-hot matmul (stays in vregs) -------------
        iota_v = lax.broadcasted_iota(jnp.int32, (V, chunk), 0)   # V on sublanes
        onehot = (iota_v == flat).astype(jnp.bfloat16)            # (V, Ksub), exact 0/1

        feats = scene_ref[pl.ds(s, chunk), :]                     # (Ksub, C) bf16 RHS
        fsum_ref[...] += jnp.dot(onehot, feats,
                                 preferred_element_type=jnp.float32)   # (V, C) f32
        # counts: XLU row-sum of the one-hot chunk (exact integers in f32).
        cnt_ref[...] += jnp.sum(onehot.astype(jnp.float32), axis=1, keepdims=True)
        return carry

    lax.fori_loop(0, n_chunks, chunk_body, 0, unroll=True)


# ----------------------------------------------------------------------------
# Wrapper: ray construction, rigid extrinsics inverse, tiling/padding, epilogue.
# ----------------------------------------------------------------------------
def image_to_voxels(scene, depth, extrinsics4f, hfov_deg, mark_agent=False, *,
                    n_tile=8192, chunk_points=256, num_core_splits=2):
    del mark_agent  # unused in the reference forward as well
    B, C, H, W = scene.shape
    N = H * W
    X, Y, Z = VOXEL_DIMS
    V = X * Y * Z

    scene = scene.astype(jnp.float32)
    depth = depth.astype(jnp.float32)

    rays = _build_rays(H, W, hfov_deg)                                       # (3, N)
    inv_ext = _invert_extrinsics(extrinsics4f.reshape(B, 4, 4).astype(jnp.float32))
    inv_ext_flat = inv_ext.reshape(B * 16)                                   # SMEM table

    depth_flat = depth.reshape(B, 1, N)
    # (B, N, C) bf16: per-chunk (Ksub, C) MXU weight operand is a plain sublane
    # slice; the bf16 cast fuses into this one transpose (no ones-row concat).
    scene_nc = jnp.swapaxes(scene.reshape(B, C, N), 1, 2).astype(jnp.bfloat16)

    # ---- point-axis tiling: NC core splits x num_n tiles of nt points -------
    NC = max(1, int(num_core_splits))
    nt = min(int(n_tile), _round_up(-(-N // NC), 128))
    nt = max(128, _round_up(nt, 128))
    chunk = max(128, (min(int(chunk_points), nt) // 128) * 128)
    while nt % chunk:                     # make the chunk size divide the tile
        chunk -= 128

    num_n_total = -(-N // nt)
    num_n = -(-num_n_total // NC)                         # tiles per core split
    n_pad = NC * num_n * nt
    if n_pad != N:                                        # padded points: depth==0 -> masked
        pad = n_pad - N
        rays = jnp.pad(rays, ((0, 0), (0, pad)))
        depth_flat = jnp.pad(depth_flat, ((0, 0), (0, 0), (0, pad)))
        scene_nc = jnp.pad(scene_nc, ((0, 0), (0, pad), (0, 0)))

    kernel = partial(_image_to_voxels_kernel, C=C, X=X, Y=Y, Z=Z,
                     origin=VOXEL_ORIGIN, res=VOXEL_RES, chunk=chunk)

    fsum, cnt = pl.pallas_call(
        kernel,
        out_shape=(jax.ShapeDtypeStruct((B, NC, V, C), jnp.float32),
                   jax.ShapeDtypeStruct((B, NC, V, 1), jnp.float32)),
        grid_spec=pltpu.PrefetchScalarGridSpec(
            num_scalar_prefetch=0,
            grid=(B, NC, num_n),
            in_specs=(
                pl.BlockSpec((3, nt), lambda b, h, n: (0, h * num_n + n)),        # rays
                pl.BlockSpec((None, 1, nt), lambda b, h, n: (b, 0, h * num_n + n)),  # depth
                pl.BlockSpec((None, nt, C), lambda b, h, n: (b, h * num_n + n, 0)),  # features
                pl.BlockSpec(memory_space=pltpu.MemorySpace.SMEM),                 # cam->world
            ),
            out_specs=(
                pl.BlockSpec((None, None, V, C), lambda b, h, n: (b, h, 0, 0)),
                pl.BlockSpec((None, None, V, 1), lambda b, h, n: (b, h, 0, 0)),
            ),
        ),
        compiler_params=pltpu.CompilerParams(
            dimension_semantics=("parallel", "parallel", "arbitrary"),
            vmem_limit_bytes=32 * 1024 * 1024),
    )(rays, depth_flat, scene_nc, inv_ext_flat)

    # ---- tiny XLA epilogue: combine core partials, mean-pool, occupancy -----
    fsum_tot = jnp.sum(fsum, axis=1)                      # (B, V, C)
    cnt_tot = jnp.sum(cnt, axis=1)                        # (B, V, 1)
    data = fsum_tot / (cnt_tot + 1e-10)
    occ = (cnt_tot > 0.0).astype(jnp.float32)
    data = jnp.swapaxes(data, 1, 2).reshape(B, C, X, Y, Z)
    occ = jnp.swapaxes(occ, 1, 2).reshape(B, 1, X, Y, Z)
    # TODO(synk): the torch module returns a VoxelGrid object; we return its two tensors.
    return {"data": data, "occupancy": occ}


# ----------------------------------------------------------------------------
# Pure-JAX reference (for correctness check only).
# ----------------------------------------------------------------------------
def _reference(scene, depth, extrinsics4f, hfov_deg):
    B, C, H, W = scene.shape
    N = H * W
    X, Y, Z = VOXEL_DIMS
    V = X * Y * Z
    rays = _build_rays(H, W, hfov_deg)
    inv_ext = _invert_extrinsics(extrinsics4f.reshape(B, 4, 4).astype(jnp.float32))
    depth_flat = depth.reshape(B, 1, N).astype(jnp.float32)
    pts_cam = rays[None] * depth_flat
    pts_w = jnp.einsum("bij,bjn->bin", inv_ext[:, :3, :3], pts_cam) + inv_ext[:, :3, 3:4]
    vi = jnp.floor((pts_w - jnp.array(VOXEL_ORIGIN).reshape(1, 3, 1)) / VOXEL_RES).astype(jnp.int32)
    dims = jnp.array(VOXEL_DIMS).reshape(1, 3, 1)
    valid = jnp.all((vi >= 0) & (vi < dims), axis=1) & (depth_flat[:, 0] > 0)
    flat = jnp.where(valid, vi[:, 0] * (Y * Z) + vi[:, 1] * Z + vi[:, 2], V)
    feats = scene.reshape(B, C, N).astype(jnp.float32)
    data_out, occ_out = [], []
    for b in range(B):
        pts_attr = jnp.concatenate([feats[b], jnp.ones((1, N), jnp.float32)], 0).T  # (N, C+1)
        seg = jnp.zeros((V + 1, C + 1), jnp.float32).at[flat[b]].add(pts_attr)[:V]  # (V, C+1)
        counts = seg[:, C:C + 1]
        data_out.append((seg[:, :C] / (counts + 1e-10)).T.reshape(C, X, Y, Z))
        occ_out.append((counts > 0).astype(jnp.float32).T.reshape(1, X, Y, Z))
    return jnp.stack(data_out), jnp.stack(occ_out)


if __name__ == "__main__":
    key = jax.random.PRNGKey(0)
    B, C, H, W = 2, 4, 32, 32
    k1, k2 = jax.random.split(key)
    scene = jax.random.uniform(k1, (B, C, H, W), jnp.float32)
    depth = jax.random.uniform(k2, (B, 1, H, W), jnp.float32, minval=0.5, maxval=3.0)

    # world->camera extrinsics: identity rotation + small per-batch translation
    eye = jnp.eye(4, dtype=jnp.float32)
    e0 = eye.at[0, 3].set(0.3)
    e1 = eye.at[1, 3].set(-0.2)
    extrinsics4f = jnp.stack([e0, e1], axis=0)[:, None]  # (B, 1, 4, 4)
    hfov_deg = 60.0

    # Small tiles/chunks so the test exercises: 2 core splits x 2 N-tiles per
    # split x 2 point-chunks per tile, plus the accumulator across tiles.
    out = image_to_voxels(scene, depth, extrinsics4f, hfov_deg,
                          n_tile=256, chunk_points=128, num_core_splits=2)
    out = jax.block_until_ready(out)

    ref_data, ref_occ = _reference(scene, depth, extrinsics4f, hfov_deg)
    # Occupancy / counts are exact (0/1 one-hot is exact in bf16, f32 accumulation).
    np.testing.assert_allclose(np.asarray(out["occupancy"]), np.asarray(ref_occ),
                               rtol=1e-6, atol=1e-6)
    # Features pass through one bf16 cast (<= ~0.4% relative error), f32 accumulation.
    np.testing.assert_allclose(np.asarray(out["data"]), np.asarray(ref_data),
                               rtol=1e-2, atol=2e-3)

    print("KERNEL_OK")
</pallas_src>

<mosaic_0001>
module attributes {stable_mosaic.version = 11 : i64} {
  func.func @_image_to_voxels_kernel(%arg0: i32, %arg1: i32, %arg2: i32, %arg3: memref<3x256xf32, #tpu.memory_space<vmem>>, %arg4: memref<1x1x256xf32, #tpu.memory_space<vmem>>, %arg5: memref<1x256x4xbf16, #tpu.memory_space<vmem>>, %arg6: memref<32xf32, #tpu.memory_space<smem>>, %arg7: memref<1x1x256x4xf32, #tpu.memory_space<vmem>>, %arg8: memref<1x1x256x1xf32, #tpu.memory_space<vmem>>) attributes {dimension_semantics = [#tpu.dimension_semantics<parallel>, #tpu.dimension_semantics<parallel>, #tpu.dimension_semantics<arbitrary>], iteration_bounds = array<i64: 2, 2, 2>, scalar_prefetch = 0 : i64, scratch_operands = 0 : i64, tpu.core_type = #tpu.core_type<tc>, window_params = [{transform_indices = @transform_0, window_bounds = array<i64: 3, 256>}, {transform_indices = @transform_1, window_bounds = array<i64: 1, 1, 256>}, {transform_indices = @transform_2, window_bounds = array<i64: 1, 256, 4>}, {transform_indices = @transform_3, window_bounds = array<i64: 32>}, {transform_indices = @transform_4, window_bounds = array<i64: 1, 1, 256, 4>}, {transform_indices = @transform_5, window_bounds = array<i64: 1, 1, 256, 1>}]} {
    %c0_i32 = arith.constant 0 : i32
    %0 = arith.cmpi eq, %arg2, %c0_i32 : i32
    %1 = arith.extui %0 : i1 to i32
    %c0_i32_0 = arith.constant 0 : i32
    %2 = arith.cmpi ne, %1, %c0_i32_0 : i32
    scf.if %2 {
      %cst_100 = arith.constant 0.000000e+00 : f32
      %282 = vector.broadcast %cst_100 : f32 to vector<256x4xf32>
      %c0_101 = arith.constant 0 : index
      %c0_102 = arith.constant 0 : index
      %c0_103 = arith.constant 0 : index
      %c0_104 = arith.constant 0 : index
      %283 = vector.load %arg7[%c0_101, %c0_102, %c0_103, %c0_104] : memref<1x1x256x4xf32, #tpu.memory_space<vmem>>, vector<1x1x256x4xf32>
      %284 = vector.shape_cast %283 : vector<1x1x256x4xf32> to vector<256x4xf32>
      %285 = vector.shape_cast %282 : vector<256x4xf32> to vector<1x1x256x4xf32>
      tpu.vector_store %arg7[%c0_101, %c0_102, %c0_103, %c0_104], %285 {strides = array<i32>} : memref<1x1x256x4xf32, #tpu.memory_space<vmem>>, vector<1x1x256x4xf32>,
      %cst_105 = arith.constant 0.000000e+00 : f32
      %286 = vector.broadcast %cst_105 : f32 to vector<256x1xf32>
      %c0_106 = arith.constant 0 : index
      %c0_107 = arith.constant 0 : index
      %c0_108 = arith.constant 0 : index
      %c0_109 = arith.constant 0 : index
      %287 = vector.load %arg8[%c0_106, %c0_107, %c0_108, %c0_109] : memref<1x1x256x1xf32, #tpu.memory_space<vmem>>, vector<1x1x256x1xf32>
      %288 = vector.shape_cast %287 : vector<1x1x256x1xf32> to vector<256x1xf32>
      %289 = vector.shape_cast %286 : vector<256x1xf32> to vector<1x1x256x1xf32>
      tpu.vector_store %arg8[%c0_106, %c0_107, %c0_108, %c0_109], %289 {strides = array<i32>} : memref<1x1x256x1xf32, #tpu.memory_space<vmem>>, vector<1x1x256x1xf32>,
    } else {
    }
    %c16_i32 = arith.constant 16 : i32
    %3 = arith.muli %c16_i32, %arg0 : i32
    %c0_i32_1 = arith.constant 0 : i32
    %4 = arith.addi %3, %c0_i32_1 : i32
    %c0_i32_2 = arith.constant 0 : i32
    %5 = arith.addi %4, %c0_i32_2 : i32
    %6 = arith.index_cast %5 : i32 to index
    %7 = memref.load %arg6[%6] : memref<32xf32, #tpu.memory_space<smem>>
    %c0_i32_3 = arith.constant 0 : i32
    %8 = arith.addi %3, %c0_i32_3 : i32
    %c1_i32 = arith.constant 1 : i32
    %9 = arith.addi %8, %c1_i32 : i32
    %10 = arith.index_cast %9 : i32 to index
    %11 = memref.load %arg6[%10] : memref<32xf32, #tpu.memory_space<smem>>
    %c0_i32_4 = arith.constant 0 : i32
    %12 = arith.addi %3, %c0_i32_4 : i32
    %c2_i32 = arith.constant 2 : i32
    %13 = arith.addi %12, %c2_i32 : i32
    %14 = arith.index_cast %13 : i32 to index
    %15 = memref.load %arg6[%14] : memref<32xf32, #tpu.memory_space<smem>>
    %c0_i32_5 = arith.constant 0 : i32
    %16 = arith.addi %3, %c0_i32_5 : i32
    %c3_i32 = arith.constant 3 : i32
    %17 = arith.addi %16, %c3_i32 : i32
    %18 = arith.index_cast %17 : i32 to index
    %19 = memref.load %arg6[%18] : memref<32xf32, #tpu.memory_space<smem>>
    %c4_i32 = arith.constant 4 : i32
    %20 = arith.addi %3, %c4_i32 : i32
    %c0_i32_6 = arith.constant 0 : i32
    %21 = arith.addi %20, %c0_i32_6 : i32
    %22 = arith.index_cast %21 : i32 to index
    %23 = memref.load %arg6[%22] : memref<32xf32, #tpu.memory_space<smem>>
    %c4_i32_7 = arith.constant 4 : i32
    %24 = arith.addi %3, %c4_i32_7 : i32
    %c1_i32_8 = arith.constant 1 : i32
    %25 = arith.addi %24, %c1_i32_8 : i32
    %26 = arith.index_cast %25 : i32 to index
    %27 = memref.load %arg6[%26] : memref<32xf32, #tpu.memory_space<smem>>
    %c4_i32_9 = arith.constant 4 : i32
    %28 = arith.addi %3, %c4_i32_9 : i32
    %c2_i32_10 = arith.constant 2 : i32
    %29 = arith.addi %28, %c2_i32_10 : i32
    %30 = arith.index_cast %29 : i32 to index
    %31 = memref.load %arg6[%30] : memref<32xf32, #tpu.memory_space<smem>>
    %c4_i32_11 = arith.constant 4 : i32
    %32 = arith.addi %3, %c4_i32_11 : i32
    %c3_i32_12 = arith.constant 3 : i32
    %33 = arith.addi %32, %c3_i32_12 : i32
    %34 = arith.index_cast %33 : i32 to index
    %35 = memref.load %arg6[%34] : memref<32xf32, #tpu.memory_space<smem>>
    %c8_i32 = arith.constant 8 : i32
    %36 = arith.addi %3, %c8_i32 : i32
    %c0_i32_13 = arith.constant 0 : i32
    %37 = arith.addi %36, %c0_i32_13 : i32
    %38 = arith.index_cast %37 : i32 to index
    %39 = memref.load %arg6[%38] : memref<32xf32, #tpu.memory_space<smem>>
    %c8_i32_14 = arith.constant 8 : i32
    %40 = arith.addi %3, %c8_i32_14 : i32
    %c1_i32_15 = arith.constant 1 : i32
    %41 = arith.addi %40, %c1_i32_15 : i32
    %42 = arith.index_cast %41 : i32 to index
    %43 = memref.load %arg6[%42] : memref<32xf32, #tpu.memory_space<smem>>
    %c8_i32_16 = arith.constant 8 : i32
    %44 = arith.addi %3, %c8_i32_16 : i32
    %c2_i32_17 = arith.constant 2 : i32
    %45 = arith.addi %44, %c2_i32_17 : i32
    %46 = arith.index_cast %45 : i32 to index
    %47 = memref.load %arg6[%46] : memref<32xf32, #tpu.memory_space<smem>>
    %c8_i32_18 = arith.constant 8 : i32
    %48 = arith.addi %3, %c8_i32_18 : i32
    %c3_i32_19 = arith.constant 3 : i32
    %49 = arith.addi %48, %c3_i32_19 : i32
    %50 = arith.index_cast %49 : i32 to index
    %51 = memref.load %arg6[%50] : memref<32xf32, #tpu.memory_space<smem>>
    %c0_i32_20 = arith.constant 0 : i32
    %c128_i32 = arith.constant 128 : i32
    %52 = arith.muli %c0_i32_20, %c128_i32 : i32
    %53 = tpu.assume_multiple %52, 128 : i32
    %c0 = arith.constant 0 : index
    %c0_21 = arith.constant 0 : index
    %54 = arith.index_cast %53 : i32 to index
    %55 = vector.load %arg4[%c0, %c0_21, %54] : memref<1x1x256xf32, #tpu.memory_space<vmem>>, vector<1x1x128xf32>
    %56 = vector.shape_cast %55 : vector<1x1x128xf32> to vector<1x128xf32>
    %c0_22 = arith.constant 0 : index
    %57 = arith.index_cast %53 : i32 to index
    %58 = vector.load %arg3[%c0_22, %57] : memref<3x256xf32, #tpu.memory_space<vmem>>, vector<1x128xf32>
    %c1 = arith.constant 1 : index
    %59 = arith.index_cast %53 : i32 to index
    %60 = vector.load %arg3[%c1, %59] : memref<3x256xf32, #tpu.memory_space<vmem>>, vector<1x128xf32>
    %c2 = arith.constant 2 : index
    %61 = arith.index_cast %53 : i32 to index
    %62 = vector.load %arg3[%c2, %61] : memref<3x256xf32, #tpu.memory_space<vmem>>, vector<1x128xf32>
    %63 = arith.mulf %58, %56 : vector<1x128xf32>
    %64 = arith.mulf %60, %56 : vector<1x128xf32>
    %65 = arith.mulf %62, %56 : vector<1x128xf32>
    %66 = vector.broadcast %7 : f32 to vector<1x128xf32>
    %67 = arith.mulf %66, %63 : vector<1x128xf32>
    %68 = vector.broadcast %11 : f32 to vector<1x128xf32>
    %69 = arith.mulf %68, %64 : vector<1x128xf32>
    %70 = arith.addf %67, %69 : vector<1x128xf32>
    %71 = vector.broadcast %15 : f32 to vector<1x128xf32>
    %72 = arith.mulf %71, %65 : vector<1x128xf32>
    %73 = arith.addf %70, %72 : vector<1x128xf32>
    %74 = vector.broadcast %19 : f32 to vector<1x128xf32>
    %75 = arith.addf %73, %74 : vector<1x128xf32>
    %76 = vector.broadcast %23 : f32 to vector<1x128xf32>
    %77 = arith.mulf %76, %63 : vector<1x128xf32>
    %78 = vector.broadcast %27 : f32 to vector<1x128xf32>
    %79 = arith.mulf %78, %64 : vector<1x128xf32>
    %80 = arith.addf %77, %79 : vector<1x128xf32>
    %81 = vector.broadcast %31 : f32 to vector<1x128xf32>
    %82 = arith.mulf %81, %65 : vector<1x128xf32>
    %83 = arith.addf %80, %82 : vector<1x128xf32>
    %84 = vector.broadcast %35 : f32 to vector<1x128xf32>
    %85 = arith.addf %83, %84 : vector<1x128xf32>
    %86 = vector.broadcast %39 : f32 to vector<1x128xf32>
    %87 = arith.mulf %86, %63 : vector<1x128xf32>
    %88 = vector.broadcast %43 : f32 to vector<1x128xf32>
    %89 = arith.mulf %88, %64 : vector<1x128xf32>
    %90 = arith.addf %87, %89 : vector<1x128xf32>
    %91 = vector.broadcast %47 : f32 to vector<1x128xf32>
    %92 = arith.mulf %91, %65 : vector<1x128xf32>
    %93 = arith.addf %90, %92 : vector<1x128xf32>
    %94 = vector.broadcast %51 : f32 to vector<1x128xf32>
    %95 = arith.addf %93, %94 : vector<1x128xf32>
    %cst = arith.constant -2.000000e+00 : f32
    %96 = vector.broadcast %cst : f32 to vector<1x128xf32>
    %97 = arith.subf %75, %96 : vector<1x128xf32>
    %cst_23 = arith.constant 2.000000e+00 : f32
    %98 = vector.broadcast %cst_23 : f32 to vector<1x128xf32>
    %99 = arith.mulf %97, %98 : vector<1x128xf32>
    %100 = math.floor %99 : vector<1x128xf32>
    %101 = arith.fptosi %100 : vector<1x128xf32> to vector<1x128xi32>
    %cst_24 = arith.constant -2.000000e+00 : f32
    %102 = vector.broadcast %cst_24 : f32 to vector<1x128xf32>
    %103 = arith.subf %85, %102 : vector<1x128xf32>
    %cst_25 = arith.constant 2.000000e+00 : f32
    %104 = vector.broadcast %cst_25 : f32 to vector<1x128xf32>
    %105 = arith.mulf %103, %104 : vector<1x128xf32>
    %106 = math.floor %105 : vector<1x128xf32>
    %107 = arith.fptosi %106 : vector<1x128xf32> to vector<1x128xi32>
    %cst_26 = arith.constant -5.000000e-01 : f32
    %108 = vector.broadcast %cst_26 : f32 to vector<1x128xf32>
    %109 = arith.subf %95, %108 : vector<1x128xf32>
    %cst_27 = arith.constant 2.000000e+00 : f32
    %110 = vector.broadcast %cst_27 : f32 to vector<1x128xf32>
    %111 = arith.mulf %109, %110 : vector<1x128xf32>
    %112 = math.floor %111 : vector<1x128xf32>
    %113 = arith.fptosi %112 : vector<1x128xf32> to vector<1x128xi32>
    %cst_28 = arith.constant 0.000000e+00 : f32
    %114 = vector.broadcast %cst_28 : f32 to vector<1x128xf32>
    %115 = arith.cmpf ogt, %56, %114 : vector<1x128xf32>
    %c0_i32_29 = arith.constant 0 : i32
    %116 = vector.broadcast %c0_i32_29 : i32 to vector<1x128xi32>
    %117 = arith.cmpi sge, %101, %116 : vector<1x128xi32>
    %118 = arith.andi %115, %117 : vector<1x128xi1>
    %c8_i32_30 = arith.constant 8 : i32
    %119 = vector.broadcast %c8_i32_30 : i32 to vector<1x128xi32>
    %120 = arith.cmpi slt, %101, %119 : vector<1x128xi32>
    %121 = arith.andi %118, %120 : vector<1x128xi1>
    %c0_i32_31 = arith.constant 0 : i32
    %122 = vector.broadcast %c0_i32_31 : i32 to vector<1x128xi32>
    %123 = arith.cmpi sge, %107, %122 : vector<1x128xi32>
    %124 = arith.andi %121, %123 : vector<1x128xi1>
    %c8_i32_32 = arith.constant 8 : i32
    %125 = vector.broadcast %c8_i32_32 : i32 to vector<1x128xi32>
    %126 = arith.cmpi slt, %107, %125 : vector<1x128xi32>
    %127 = arith.andi %124, %126 : vector<1x128xi1>
    %c0_i32_33 = arith.constant 0 : i32
    %128 = vector.broadcast %c0_i32_33 : i32 to vector<1x128xi32>
    %129 = arith.cmpi sge, %113, %128 : vector<1x128xi32>
    %130 = arith.andi %127, %129 : vector<1x128xi1>
    %c4_i32_34 = arith.constant 4 : i32
    %131 = vector.broadcast %c4_i32_34 : i32 to vector<1x128xi32>
    %132 = arith.cmpi slt, %113, %131 : vector<1x128xi32>
    %133 = arith.andi %130, %132 : vector<1x128xi1>
    %c32_i32 = arith.constant 32 : i32
    %134 = vector.broadcast %c32_i32 : i32 to vector<1x128xi32>
    %135 = arith.muli %101, %134 : vector<1x128xi32>
    %c4_i32_35 = arith.constant 4 : i32
    %136 = vector.broadcast %c4_i32_35 : i32 to vector<1x128xi32>
    %137 = arith.muli %107, %136 : vector<1x128xi32>
    %138 = arith.addi %135, %137 : vector<1x128xi32>
    %139 = arith.addi %138, %113 : vector<1x128xi32>
    %c-1_i32 = arith.constant -1 : i32
    %140 = vector.broadcast %c-1_i32 : i32 to vector<1x128xi32>
    %141 = arith.select %133, %139, %140 : vector<1x128xi1>, vector<1x128xi32>
    %142 = tpu.iota {dimensions = array<i32: 0>} : vector<256x128xi32>
    %143 = vector.broadcast %141 : vector<1x128xi32> to vector<256x128xi32>
    %144 = arith.cmpi eq, %142, %143 : vector<256x128xi32>
    %145 = arith.extui %144 : vector<256x128xi1> to vector<256x128xi32>
    %146 = arith.sitofp %145 : vector<256x128xi32> to vector<256x128xf32>
    %147 = arith.truncf %146 : vector<256x128xf32> to vector<256x128xbf16>
    %c0_36 = arith.constant 0 : index
    %148 = arith.index_cast %53 : i32 to index
    %c0_37 = arith.constant 0 : index
    %149 = vector.load %arg5[%c0_36, %148, %c0_37] : memref<1x256x4xbf16, #tpu.memory_space<vmem>>, vector<1x128x4xbf16>
    %150 = vector.shape_cast %149 : vector<1x128x4xbf16> to vector<128x4xbf16>
    %c0_38 = arith.constant 0 : index
    %c0_39 = arith.constant 0 : index
    %c0_40 = arith.constant 0 : index
    %c0_41 = arith.constant 0 : index
    %151 = vector.load %arg7[%c0_38, %c0_39, %c0_40, %c0_41] : memref<1x1x256x4xf32, #tpu.memory_space<vmem>>, vector<1x1x256x4xf32>
    %152 = vector.shape_cast %151 : vector<1x1x256x4xf32> to vector<256x4xf32>
    %cst_42 = arith.constant dense<0.000000e+00> : vector<256x4xf32>
    %153 = tpu.matmul %147, %150, %cst_42 {dimension_numbers = #tpu.dot_dimension_numbers<[1], [0], [0], [1], [0, 0, 1, 1], [], []>} : vector<256x128xbf16>, vector<128x4xbf16>, vector<256x4xf32> -> vector<256x4xf32>
    %154 = arith.addf %152, %153 : vector<256x4xf32>
    %c0_43 = arith.constant 0 : index
    %c0_44 = arith.constant 0 : index
    %c0_45 = arith.constant 0 : index
    %c0_46 = arith.constant 0 : index
    %155 = vector.load %arg7[%c0_43, %c0_44, %c0_45, %c0_46] : memref<1x1x256x4xf32, #tpu.memory_space<vmem>>, vector<1x1x256x4xf32>
    %156 = vector.shape_cast %155 : vector<1x1x256x4xf32> to vector<256x4xf32>
    %157 = vector.shape_cast %154 : vector<256x4xf32> to vector<1x1x256x4xf32>
    tpu.vector_store %arg7[%c0_43, %c0_44, %c0_45, %c0_46], %157 {strides = array<i32>} : memref<1x1x256x4xf32, #tpu.memory_space<vmem>>, vector<1x1x256x4xf32>,
    %c0_47 = arith.constant 0 : index
    %c0_48 = arith.constant 0 : index
    %c0_49 = arith.constant 0 : index
    %c0_50 = arith.constant 0 : index
    %158 = vector.load %arg8[%c0_47, %c0_48, %c0_49, %c0_50] : memref<1x1x256x1xf32, #tpu.memory_space<vmem>>, vector<1x1x256x1xf32>
    %159 = vector.shape_cast %158 : vector<1x1x256x1xf32> to vector<256x1xf32>
    %160 = arith.extf %147 : vector<256x128xbf16> to vector<256x128xf32>
    %cst_51 = arith.constant dense<0.000000e+00> : vector<256xf32>
    %161 = vector.multi_reduction <add>, %160, %cst_51 [1] : vector<256x128xf32> to vector<256xf32>
    %162 = vector.shape_cast %161 : vector<256xf32> to vector<256x1xf32>
    %163 = arith.addf %159, %162 : vector<256x1xf32>
    %c0_52 = arith.constant 0 : index
    %c0_53 = arith.constant 0 : index
    %c0_54 = arith.constant 0 : index
    %c0_55 = arith.constant 0 : index
    %164 = vector.load %arg8[%c0_52, %c0_53, %c0_54, %c0_55] : memref<1x1x256x1xf32, #tpu.memory_space<vmem>>, vector<1x1x256x1xf32>
    %165 = vector.shape_cast %164 : vector<1x1x256x1xf32> to vector<256x1xf32>
    %166 = vector.shape_cast %163 : vector<256x1xf32> to vector<1x1x256x1xf32>
    tpu.vector_store %arg8[%c0_52, %c0_53, %c0_54, %c0_55], %166 {strides = array<i32>} : memref<1x1x256x1xf32, #tpu.memory_space<vmem>>, vector<1x1x256x1xf32>,
    %c1_i32_56 = arith.constant 1 : i32
    %c128_i32_57 = arith.constant 128 : i32
    %167 = arith.muli %c1_i32_56, %c128_i32_57 : i32
    %168 = tpu.assume_multiple %167, 128 : i32
    %c0_58 = arith.constant 0 : index
    %c0_59 = arith.constant 0 : index
    %169 = arith.index_cast %168 : i32 to index
    %170 = vector.load %arg4[%c0_58, %c0_59, %169] : memref<1x1x256xf32, #tpu.memory_space<vmem>>, vector<1x1x128xf32>
    %171 = vector.shape_cast %170 : vector<1x1x128xf32> to vector<1x128xf32>
    %c0_60 = arith.constant 0 : index
    %172 = arith.index_cast %168 : i32 to index
    %173 = vector.load %arg3[%c0_60, %172] : memref<3x256xf32, #tpu.memory_space<vmem>>, vector<1x128xf32>
    %c1_61 = arith.constant 1 : index
    %174 = arith.index_cast %168 : i32 to index
    %175 = vector.load %arg3[%c1_61, %174] : memref<3x256xf32, #tpu.memory_space<vmem>>, vector<1x128xf32>
    %c2_62 = arith.constant 2 : index
    %176 = arith.index_cast %168 : i32 to index
    %177 = vector.load %arg3[%c2_62, %176] : memref<3x256xf32, #tpu.memory_space<vmem>>, vector<1x128xf32>
    %178 = arith.mulf %173, %171 : vector<1x128xf32>
    %179 = arith.mulf %175, %171 : vector<1x128xf32>
    %180 = arith.mulf %177, %171 : vector<1x128xf32>
    %181 = vector.broadcast %7 : f32 to vector<1x128xf32>
    %182 = arith.mulf %181, %178 : vector<1x128xf32>
    %183 = vector.broadcast %11 : f32 to vector<1x128xf32>
    %184 = arith.mulf %183, %179 : vector<1x128xf32>
    %185 = arith.addf %182, %184 : vector<1x128xf32>
    %186 = vector.broadcast %15 : f32 to vector<1x128xf32>
    %187 = arith.mulf %186, %180 : vector<1x128xf32>
    %188 = arith.addf %185, %187 : vector<1x128xf32>
    %189 = vector.broadcast %19 : f32 to vector<1x128xf32>
    %190 = arith.addf %188, %189 : vector<1x128xf32>
    %191 = vector.broadcast %23 : f32 to vector<1x128xf32>
    %192 = arith.mulf %191, %178 : vector<1x128xf32>
    %193 = vector.broadcast %27 : f32 to vector<1x128xf32>
    %194 = arith.mulf %193, %179 : vector<1x128xf32>
    %195 = arith.addf %192, %194 : vector<1x128xf32>
    %196 = vector.broadcast %31 : f32 to vector<1x128xf32>
    %197 = arith.mulf %196, %180 : vector<1x128xf32>
    %198 = arith.addf %195, %197 : vector<1x128xf32>
    %199 = vector.broadcast %35 : f32 to vector<1x128xf32>
    %200 = arith.addf %198, %199 : vector<1x128xf32>
    %201 = vector.broadcast %39 : f32 to vector<1x128xf32>
    %202 = arith.mulf %201, %178 : vector<1x128xf32>
    %203 = vector.broadcast %43 : f32 to vector<1x128xf32>
    %204 = arith.mulf %203, %179 : vector<1x128xf32>
    %205 = arith.addf %202, %204 : vector<1x128xf32>
    %206 = vector.broadcast %47 : f32 to vector<1x128xf32>
    %207 = arith.mulf %206, %180 : vector<1x128xf32>
    %208 = arith.addf %205, %207 : vector<1x128xf32>
    %209 = vector.broadcast %51 : f32 to vector<1x128xf32>
    %210 = arith.addf %208, %209 : vector<1x128xf32>
    %cst_63 = arith.constant -2.000000e+00 : f32
    %211 = vector.broadcast %cst_63 : f32 to vector<1x128xf32>
    %212 = arith.subf %190, %211 : vector<1x128xf32>
    %cst_64 = arith.constant 2.000000e+00 : f32
    %213 = vector.broadcast %cst_64 : f32 to vector<1x128xf32>
    %214 = arith.mulf %212, %213 : vector<1x128xf32>
    %215 = math.floor %214 : vector<1x128xf32>
    %216 = arith.fptosi %215 : vector<1x128xf32> to vector<1x128xi32>
    %cst_65 = arith.constant -2.000000e+00 : f32
    %217 = vector.broadcast %cst_65 : f32 to vector<1x128xf32>
    %218 = arith.subf %200, %217 : vector<1x128xf32>
    %cst_66 = arith.constant 2.000000e+00 : f32
    %219 = vector.broadcast %cst_66 : f32 to vector<1x128xf32>
    %220 = arith.mulf %218, %219 : vector<1x128xf32>
    %221 = math.floor %220 : vector<1x128xf32>
    %222 = arith.fptosi %221 : vector<1x128xf32> to vector<1x128xi32>
    %cst_67 = arith.constant -5.000000e-01 : f32
    %223 = vector.broadcast %cst_67 : f32 to vector<1x128xf32>
    %224 = arith.subf %210, %223 : vector<1x128xf32>
    %cst_68 = arith.constant 2.000000e+00 : f32
    %225 = vector.broadcast %cst_68 : f32 to vector<1x128xf32>
    %226 = arith.mulf %224, %225 : vector<1x128xf32>
    %227 = math.floor %226 : vector<1x128xf32>
    %228 = arith.fptosi %227 : vector<1x128xf32> to vector<1x128xi32>
    %cst_69 = arith.constant 0.000000e+00 : f32
    %229 = vector.broadcast %cst_69 : f32 to vector<1x128xf32>
    %230 = arith.cmpf ogt, %171, %229 : vector<1x128xf32>
    %c0_i32_70 = arith.constant 0 : i32
    %231 = vector.broadcast %c0_i32_70 : i32 to vector<1x128xi32>
    %232 = arith.cmpi sge, %216, %231 : vector<1x128xi32>
    %233 = arith.andi %230, %232 : vector<1x128xi1>
    %c8_i32_71 = arith.constant 8 : i32
    %234 = vector.broadcast %c8_i32_71 : i32 to vector<1x128xi32>
    %235 = arith.cmpi slt, %216, %234 : vector<1x128xi32>
    %236 = arith.andi %233, %235 : vector<1x128xi1>
    %c0_i32_72 = arith.constant 0 : i32
    %237 = vector.broadcast %c0_i32_72 : i32 to vector<1x128xi32>
    %238 = arith.cmpi sge, %222, %237 : vector<1x128xi32>
    %239 = arith.andi %236, %238 : vector<1x128xi1>
    %c8_i32_73 = arith.constant 8 : i32
    %240 = vector.broadcast %c8_i32_73 : i32 to vector<1x128xi32>
    %241 = arith.cmpi slt, %222, %240 : vector<1x128xi32>
    %242 = arith.andi %239, %241 : vector<1x128xi1>
    %c0_i32_74 = arith.constant 0 : i32
    %243 = vector.broadcast %c0_i32_74 : i32 to vector<1x128xi32>
    %244 = arith.cmpi sge, %228, %243 : vector<1x128xi32>
    %245 = arith.andi %242, %244 : vector<1x128xi1>
    %c4_i32_75 = arith.constant 4 : i32
    %246 = vector.broadcast %c4_i32_75 : i32 to vector<1x128xi32>
    %247 = arith.cmpi slt, %228, %246 : vector<1x128xi32>
    %248 = arith.andi %245, %247 : vector<1x128xi1>
    %c32_i32_76 = arith.constant 32 : i32
    %249 = vector.broadcast %c32_i32_76 : i32 to vector<1x128xi32>
    %250 = arith.muli %216, %249 : vector<1x128xi32>
    %c4_i32_77 = arith.constant 4 : i32
    %251 = vector.broadcast %c4_i32_77 : i32 to vector<1x128xi32>
    %252 = arith.muli %222, %251 : vector<1x128xi32>
    %253 = arith.addi %250, %252 : vector<1x128xi32>
    %254 = arith.addi %253, %228 : vector<1x128xi32>
    %c-1_i32_78 = arith.constant -1 : i32
    %255 = vector.broadcast %c-1_i32_78 : i32 to vector<1x128xi32>
    %256 = arith.select %248, %254, %255 : vector<1x128xi1>, vector<1x128xi32>
    %257 = tpu.iota {dimensions = array<i32: 0>} : vector<256x128xi32>
    %258 = vector.broadcast %256 : vector<1x128xi32> to vector<256x128xi32>
    %259 = arith.cmpi eq, %257, %258 : vector<256x128xi32>
    %260 = arith.extui %259 : vector<256x128xi1> to vector<256x128xi32>
    %261 = arith.sitofp %260 : vector<256x128xi32> to vector<256x128xf32>
    %262 = arith.truncf %261 : vector<256x128xf32> to vector<256x128xbf16>
    %c0_79 = arith.constant 0 : index
    %263 = arith.index_cast %168 : i32 to index
    %c0_80 = arith.constant 0 : index
    %264 = vector.load %arg5[%c0_79, %263, %c0_80] : memref<1x256x4xbf16, #tpu.memory_space<vmem>>, vector<1x128x4xbf16>
    %265 = vector.shape_cast %264 : vector<1x128x4xbf16> to vector<128x4xbf16>
    %c0_81 = arith.constant 0 : index
    %c0_82 = arith.constant 0 : index
    %c0_83 = arith.constant 0 : index
    %c0_84 = arith.constant 0 : index
    %266 = vector.load %arg7[%c0_81, %c0_82, %c0_83, %c0_84] : memref<1x1x256x4xf32, #tpu.memory_space<vmem>>, vector<1x1x256x4xf32>
    %267 = vector.shape_cast %266 : vector<1x1x256x4xf32> to vector<256x4xf32>
    %cst_85 = arith.constant dense<0.000000e+00> : vector<256x4xf32>
    %268 = tpu.matmul %262, %265, %cst_85 {dimension_numbers = #tpu.dot_dimension_numbers<[1], [0], [0], [1], [0, 0, 1, 1], [], []>} : vector<256x128xbf16>, vector<128x4xbf16>, vector<256x4xf32> -> vector<256x4xf32>
    %269 = arith.addf %267, %268 : vector<256x4xf32>
    %c0_86 = arith.constant 0 : index
    %c0_87 = arith.constant 0 : index
    %c0_88 = arith.constant 0 : index
    %c0_89 = arith.constant 0 : index
    %270 = vector.load %arg7[%c0_86, %c0_87, %c0_88, %c0_89] : memref<1x1x256x4xf32, #tpu.memory_space<vmem>>, vector<1x1x256x4xf32>
    %271 = vector.shape_cast %270 : vector<1x1x256x4xf32> to vector<256x4xf32>
    %272 = vector.shape_cast %269 : vector<256x4xf32> to vector<1x1x256x4xf32>
    tpu.vector_store %arg7[%c0_86, %c0_87, %c0_88, %c0_89], %272 {strides = array<i32>} : memref<1x1x256x4xf32, #tpu.memory_space<vmem>>, vector<1x1x256x4xf32>,
    %c0_90 = arith.constant 0 : index
    %c0_91 = arith.constant 0 : index
    %c0_92 = arith.constant 0 : index
    %c0_93 = arith.constant 0 : index
    %273 = vector.load %arg8[%c0_90, %c0_91, %c0_92, %c0_93] : memref<1x1x256x1xf32, #tpu.memory_space<vmem>>, vector<1x1x256x1xf32>
    %274 = vector.shape_cast %273 : vector<1x1x256x1xf32> to vector<256x1xf32>
    %275 = arith.extf %262 : vector<256x128xbf16> to vector<256x128xf32>
    %cst_94 = arith.constant dense<0.000000e+00> : vector<256xf32>
    %276 = vector.multi_reduction <add>, %275, %cst_94 [1] : vector<256x128xf32> to vector<256xf32>
    %277 = vector.shape_cast %276 : vector<256xf32> to vector<256x1xf32>
    %278 = arith.addf %274, %277 : vector<256x1xf32>
    %c0_95 = arith.constant 0 : index
    %c0_96 = arith.constant 0 : index
    %c0_97 = arith.constant 0 : index
    %c0_98 = arith.constant 0 : index
    %279 = vector.load %arg8[%c0_95, %c0_96, %c0_97, %c0_98] : memref<1x1x256x1xf32, #tpu.memory_space<vmem>>, vector<1x1x256x1xf32>
    %280 = vector.shape_cast %279 : vector<1x1x256x1xf32> to vector<256x1xf32>
    %281 = vector.shape_cast %278 : vector<256x1xf32> to vector<1x1x256x1xf32>
    tpu.vector_store %arg8[%c0_95, %c0_96, %c0_97, %c0_98], %281 {strides = array<i32>} : memref<1x1x256x1xf32, #tpu.memory_space<vmem>>, vector<1x1x256x1xf32>,
    %c2_i32_99 = arith.constant 2 : i32
    return
  }
  func.func @transform_0(%arg0: i32, %arg1: i32, %arg2: i32) -> (i32, i32) {
    %c2_i32 = arith.constant 2 : i32
    %0 = arith.muli %arg1, %c2_i32 : i32
    %1 = arith.addi %0, %arg2 : i32
    %c0_i32 = arith.constant 0 : i32
    %c0_i32_0 = arith.constant 0 : i32
    return %c0_i32, %1 : i32, i32
  }
  func.func @transform_1(%arg0: i32, %arg1: i32, %arg2: i32) -> (i32, i32, i32) {
    %c2_i32 = arith.constant 2 : i32
    %0 = arith.muli %arg1, %c2_i32 : i32
    %1 = arith.addi %0, %arg2 : i32
    %c0_i32 = arith.constant 0 : i32
    %c0_i32_0 = arith.constant 0 : i32
    return %arg0, %c0_i32, %1 : i32, i32, i32
  }
  func.func @transform_2(%arg0: i32, %arg1: i32, %arg2: i32) -> (i32, i32, i32) {
    %c2_i32 = arith.constant 2 : i32
    %0 = arith.muli %arg1, %c2_i32 : i32
    %1 = arith.addi %0, %arg2 : i32
    %c0_i32 = arith.constant 0 : i32
    %c0_i32_0 = arith.constant 0 : i32
    return %arg0, %1, %c0_i32 : i32, i32, i32
  }
  func.func @transform_3(%arg0: i32, %arg1: i32, %arg2: i32) -> i32 {
    %c0_i32 = arith.constant 0 : i32
    %c0_i32_0 = arith.constant 0 : i32
    return %c0_i32 : i32
  }
  func.func @transform_4(%arg0: i32, %arg1: i32, %arg2: i32) -> (i32, i32, i32, i32) {
    %c0_i32 = arith.constant 0 : i32
    %c0_i32_0 = arith.constant 0 : i32
    %c0_i32_1 = arith.constant 0 : i32
    return %arg0, %arg1, %c0_i32, %c0_i32_0 : i32, i32, i32, i32
  }
  func.func @transform_5(%arg0: i32, %arg1: i32, %arg2: i32) -> (i32, i32, i32, i32) {
    %c0_i32 = arith.constant 0 : i32
    %c0_i32_0 = arith.constant 0 : i32
    %c0_i32_1 = arith.constant 0 : i32
    return %arg0, %arg1, %c0_i32, %c0_i32_0 : i32, i32, i32, i32
  }
}

</mosaic_0001>

<llo_original>
// kernel: tpu_custom_call.1
$region0: #{tpu_custom_call.1}
  #allocation0 [shape = 'u32[]', space=smem, size = 0x4, offset = 0x4, fixed_abs, tag = 'smem constant byte address 0x4 - core index']
  #allocation1 [shape = 'u32[144,128]{1,0:T(1,128)}', space=vmem, size = 0x12000, scoped, tag = 'internal scratch']
  %s0 = inlined_call_operand.vmem [shape: f32[3,1024], index: 0, kind: input, shape index: {}]
  %s1 = inlined_call_operand.vmem [shape: f32[2,1,1024], index: 1, kind: input, shape index: {}]
  %s2 = inlined_call_operand.vmem [shape: bf16[2,1024,4], index: 2, kind: input, shape index: {}]
  %s3 = inlined_call_operand.vmem [shape: f32[32], index: 3, kind: input, shape index: {}]
  %s4 = inlined_call_operand.vmem [shape: f32[2,2,256,4], index: 4, kind: output, shape index: {0}]
  %s5 = inlined_call_operand.vmem [shape: f32[2,2,256,1], index: 5, kind: output, shape index: {1}]
  %6 = xla_tuple %s4, %s5
  %s7 = sld [smem:[#allocation0]]
  $region65: #{tpu_custom_call.1} parent=0
    _
  %s9 = ssub.s32 1, %s7
  %s10 = scalar_select 0, %s9, %s7
  $region1: #{tpu_custom_call.1} parent=0
    #allocation2 [shape = 'u8[512]{0}', space=smem, size = 0x200, scoped, tag = 'input window, operand 3, single buffered']
    #allocation3 [shape = 's32[2]{0}', space=sflag, size = 0x8, scoped, tag = 'scoped memory for tpu_custom_call.1']
    %11 = vsyncpa [#allocation3], 0
    loop: start=0, step=1, limit=10
    $region2: #{tpu_custom_call.1} parent=1 // loop_pre_header
      _
    $region3: #{tpu_custom_call.1} parent=1 // loop_header
      %s13 = sphi 0, %s17
      %p14 = scmp.ge.s32.totalorder %s13, 10
      %s20 = sphi 0, %s39
      %s21 = sphi 0, %s35
      %s22 = sphi 0, %s31
      %s23 = sphi 0, %s20
      %s24 = sphi 0, %s21
      %s25 = sphi 0, %s22
      %s26 = sphi 0, %s23
      %s27 = sphi 0, %s24
      %s28 = sphi 0, %s25
      %s46 = sphi 0, %s48
      %s49 = sphi 0, %s46
      %s50 = sphi 0, %s49
      %s66 = sphi 0, %s50
      %s78 = sphi 0, %s80
      %s81 = sphi 0, %s78
      %s82 = sphi 0, %s81
      %s98 = sphi 0, %s82
      %s110 = sphi 0, %s112
      %s113 = sphi 0, %s110
      %s114 = sphi 0, %s113
      %s130 = sphi 0, %s114
      %s134 = sphi 0, %s134
      %s136 = sphi 0, %s134
      %s137 = sphi 0, %s136
      %s151 = sphi 0, %s137
      %s159 = sphi 0, %s161
      %s162 = sphi 0, %s159
      %s163 = sphi 0, %s162
      %s179 = sphi 0, %s163
      %s187 = sphi 0, %s189
      %s190 = sphi 0, %s187
      %s191 = sphi 0, %s190
      %s207 = sphi 0, %s191
    $region4: #{tpu_custom_call.1} parent=1 // loop_header_branch
      %16 = sbr.rel (%p14) target = $region8
    $region5: #{tpu_custom_call.1} parent=1 // loop_body
      %s18 = ssub.s32 %s13, 1
      %s19 = ssub.s32 %s13, 2
      %s29 = sadd.s32 1, %s22
      %p30 = scmp.ge.s32.totalorder %s29, 2
      %s31 = scalar_select %p30, 0, %s29
      %s32 = sadd.s32 1, %s21
      %s33 = scalar_select %p30, %s32, %s21
      %p34 = scmp.ge.s32.totalorder %s33, 2
      %s35 = scalar_select %p34, 0, %s33
      %s36 = sadd.s32 1, %s20
      %s37 = scalar_select %p34, %s36, %s20
      %p38 = scmp.ge.s32.totalorder %s37, 2
      %s39 = scalar_select %p38, 0, %s37
      %s40 = smul.u32 %s21, 2
      %s41 = sadd.s32 %s40, %s22
      %s42 = smul.u32 %s35, 2
      %s43 = sadd.s32 %s42, %s31
      %s44 = ssub.s32 %s41, %s43
      %p45 = scmp.eq.s32.totalorder %s44, 0
      %s47 = sadd.s32 %s46, 1
      %s48 = scalar_select %p45, %s46, %s47
      %p51 = pneg %p45
      %p52 = scmp.eq.s32.totalorder %s13, 7
      %p53 = por %p51, %p52
      %p54 = scmp.ne.s32.totalorder %s46, %s49
      %p55 = scmp.eq.s32.totalorder %s13, 0
      %p56 = por %p54, %p55
      %p57 = scmp.ne.s32.totalorder %s46, %s49
      %p58 = scmp.eq.s32.totalorder %s18, 7
      %p59 = por %p57, %p58
      %p60 = scmp.ne.s32.totalorder %s49, %s50
      %p61 = scmp.eq.s32.totalorder %s18, 0
      %p62 = por %p60, %p61
      %p63 = scmp.ne.s32.totalorder %s49, %s50
      %p64 = scmp.eq.s32.totalorder %s19, 7
      %p65 = por %p63, %p64
      %p67 = scmp.ne.s32.totalorder %s50, %s66
      %p68 = scmp.eq.s32.totalorder %s19, 0
      %p69 = por %p67, %p68
      %s70 = smul.u32 %s21, 2
      %s71 = sadd.s32 %s70, %s22
      %s72 = smul.u32 %s35, 2
      %s73 = sadd.s32 %s72, %s31
      %s74 = ssub.s32 %s20, %s39
      %s75 = ssub.s32 %s71, %s73
      %s76 = sor.u32 %s74, %s75
      %p77 = scmp.eq.s32.totalorder %s76, 0
      %s79 = sadd.s32 %s78, 1
      %s80 = scalar_select %p77, %s78, %s79
      %p83 = pneg %p77
      %p84 = scmp.eq.s32.totalorder %s13, 7
      %p85 = por %p83, %p84
      %p86 = scmp.ne.s32.totalorder %s78, %s81
      %p87 = scmp.eq.s32.totalorder %s13, 0
      %p88 = por %p86, %p87
      %p89 = scmp.ne.s32.totalorder %s78, %s81
      %p90 = scmp.eq.s32.totalorder %s18, 7
      %p91 = por %p89, %p90
      %p92 = scmp.ne.s32.totalorder %s81, %s82
      %p93 = scmp.eq.s32.totalorder %s18, 0
      %p94 = por %p92, %p93
      %p95 = scmp.ne.s32.totalorder %s81, %s82
      %p96 = scmp.eq.s32.totalorder %s19, 7
      %p97 = por %p95, %p96
      %p99 = scmp.ne.s32.totalorder %s82, %s98
      %p100 = scmp.eq.s32.totalorder %s19, 0
      %p101 = por %p99, %p100
      %s102 = smul.u32 %s21, 2
      %s103 = sadd.s32 %s102, %s22
      %s104 = smul.u32 %s35, 2
      %s105 = sadd.s32 %s104, %s31
      %s106 = ssub.s32 %s20, %s39
      %s107 = ssub.s32 %s103, %s105
      %s108 = sor.u32 %s106, %s107
      %p109 = scmp.eq.s32.totalorder %s108, 0
      %s111 = sadd.s32 %s110, 1
      %s112 = scalar_select %p109, %s110, %s111
      %p115 = pneg %p109
      %p116 = scmp.eq.s32.totalorder %s13, 7
      %p117 = por %p115, %p116
      %p118 = scmp.ne.s32.totalorder %s110, %s113
      %p119 = scmp.eq.s32.totalorder %s13, 0
      %p120 = por %p118, %p119
      %p121 = scmp.ne.s32.totalorder %s110, %s113
      %p122 = scmp.eq.s32.totalorder %s18, 7
      %p123 = por %p121, %p122
      %p124 = scmp.ne.s32.totalorder %s113, %s114
      %p125 = scmp.eq.s32.totalorder %s18, 0
      %p126 = por %p124, %p125
      %p127 = scmp.ne.s32.totalorder %s113, %s114
      %p128 = scmp.eq.s32.totalorder %s19, 7
      %p129 = por %p127, %p128
      %p131 = scmp.ne.s32.totalorder %s114, %s130
      %p132 = scmp.eq.s32.totalorder %s19, 0
      %p133 = por %p131, %p132
      %s135 = sadd.s32 %s134, 1
      %p138 = scmp.eq.s32.totalorder %s13, 7
      %p139 = scmp.ne.s32.totalorder %s134, %s136
      %p140 = scmp.eq.s32.totalorder %s13, 0
      %p141 = por %p139, %p140
      %p142 = scmp.ne.s32.totalorder %s134, %s136
      %p143 = scmp.eq.s32.totalorder %s18, 7
      %p144 = por %p142, %p143
      %p145 = scmp.ne.s32.totalorder %s136, %s137
      %p146 = scmp.eq.s32.totalorder %s18, 0
      %p147 = por %p145, %p146
      %p148 = scmp.ne.s32.totalorder %s136, %s137
      %p149 = scmp.eq.s32.totalorder %s19, 7
      %p150 = por %p148, %p149
      %p152 = scmp.ne.s32.totalorder %s137, %s151
      %p153 = scmp.eq.s32.totalorder %s19, 0
      %p154 = por %p152, %p153
      %s155 = ssub.s32 %s20, %s39
      %s156 = ssub.s32 %s21, %s35
      %s157 = sor.u32 %s155, %s156
      %p158 = scmp.eq.s32.totalorder %s157, 0
      %s160 = sadd.s32 %s159, 1
      %s161 = scalar_select %p158, %s159, %s160
      %p164 = pneg %p158
      %p165 = scmp.eq.s32.totalorder %s13, 7
      %p166 = por %p164, %p165
      %p167 = scmp.ne.s32.totalorder %s159, %s162
      %p168 = scmp.eq.s32.totalorder %s13, 0
      %p169 = por %p167, %p168
      %p170 = scmp.ne.s32.totalorder %s159, %s162
      %p171 = scmp.eq.s32.totalorder %s18, 7
      %p172 = por %p170, %p171
      %p173 = scmp.ne.s32.totalorder %s162, %s163
      %p174 = scmp.eq.s32.totalorder %s18, 0
      %p175 = por %p173, %p174
      %p176 = scmp.ne.s32.totalorder %s162, %s163
      %p177 = scmp.eq.s32.totalorder %s19, 7
      %p178 = por %p176, %p177
      %p180 = scmp.ne.s32.totalorder %s163, %s179
      %p181 = scmp.eq.s32.totalorder %s19, 0
      %p182 = por %p180, %p181
      %s183 = ssub.s32 %s20, %s39
      %s184 = ssub.s32 %s21, %s35
      %s185 = sor.u32 %s183, %s184
      %p186 = scmp.eq.s32.totalorder %s185, 0
      %s188 = sadd.s32 %s187, 1
      %s189 = scalar_select %p186, %s187, %s188
      %p192 = pneg %p186
      %p193 = scmp.eq.s32.totalorder %s13, 7
      %p194 = por %p192, %p193
      %p195 = scmp.ne.s32.totalorder %s187, %s190
      %p196 = scmp.eq.s32.totalorder %s13, 0
      %p197 = por %p195, %p196
      %p198 = scmp.ne.s32.totalorder %s187, %s190
      %p199 = scmp.eq.s32.totalorder %s18, 7
      %p200 = por %p198, %p199
      %p201 = scmp.ne.s32.totalorder %s190, %s191
      %p202 = scmp.eq.s32.totalorder %s18, 0
      %p203 = por %p201, %p202
      %p204 = scmp.ne.s32.totalorder %s190, %s191
      %p205 = scmp.eq.s32.totalorder %s19, 7
      %p206 = por %p204, %p205
      %p208 = scmp.ne.s32.totalorder %s191, %s207
      %p209 = scmp.eq.s32.totalorder %s19, 0
      %p210 = por %p208, %p209
      %p211 = scmp.le.s32.totalorder 1, %s13
      %p212 = scmp.lt.s32.totalorder %s13, 9
      %p213 = pnand %p211, %p212
      %p214 = pneg %p213
      // Predicated region
      $region9: #{tpu_custom_call.1} parent=5 // pred_check
        _
      $region10: #{tpu_custom_call.1} parent=5 // pred_check_branch
        %216 = sbr.rel (%p213) target = $region12
      $region11: #{tpu_custom_call.1} parent=5 // pred_region
        %s217 = ssub.s32 %s13, 1
        // Predicated region
        $region13: #{tpu_custom_call.1} parent=11 // pred_check
          %p218 = pneg %p147
        $region14: #{tpu_custom_call.1} parent=11 // pred_check_branch
          %220 = sbr.rel (%p218) target = $region16
        $region15: #{tpu_custom_call.1} parent=11 // pred_region
          %s222 = ssub.s32 16, 16
          %223 = vsyncadd [#allocation3], %s222
          %s225 = sshll.u32 %s3, 4
          %s226 = int_to_ptr.vmem [resolvable:$true] %s225
          %228 = dma.vmem_to_smem %s226, 16, [#allocation2], [#allocation3]
        $region16: #{tpu_custom_call.1} parent=11 // pred_fallthru
          _
      $region12: #{tpu_custom_call.1} parent=5 // pred_fallthru
        _
      %p229 = scmp.lt.s32.totalorder %s13, 8
      // Predicated region
      $region17: #{tpu_custom_call.1} parent=5 // pred_check
        %p230 = pneg %p229
      $region18: #{tpu_custom_call.1} parent=5 // pred_check_branch
        %232 = sbr.rel (%p230) target = $region20
      $region19: #{tpu_custom_call.1} parent=5 // pred_region
        // Predicated region
        $region21: #{tpu_custom_call.1} parent=19 // pred_check
          %p233 = pneg %p56
        $region22: #{tpu_custom_call.1} parent=19 // pred_check_branch
          %235 = sbr.rel (%p233) target = $region24
        $region23: #{tpu_custom_call.1} parent=19 // pred_region
          %s236 = smul.u32 %s21, 2
          %s237 = sadd.s32 %s236, %s22
          %s238 = smul.u32 2, %s237
          %p239 = scmp.lt.s32.totalorder %s238, 7
          %s240 = scalar_select %p239, %s238, 7
          %s241 = smul.addr %s240, 4
          %s242 = scalar_lea.vmem %s0, %s241
          %s243 = smul.u32 %s21, 2
          %s244 = sadd.s32 %s243, %s22
          %s245 = smul.u32 2, %s244
        $region24: #{tpu_custom_call.1} parent=19 // pred_fallthru
          _
        // Predicated region
        $region25: #{tpu_custom_call.1} parent=19 // pred_check
          %p246 = pneg %p88
        $region26: #{tpu_custom_call.1} parent=19 // pred_check_branch
          %248 = sbr.rel (%p246) target = $region28
        $region27: #{tpu_custom_call.1} parent=19 // pred_region
          %s249 = smul.u32 %s21, 2
          %s250 = sadd.s32 %s249, %s22
          %s251 = smul.u32 2, %s250
          %p252 = scmp.lt.s32.totalorder %s20, 1
          %s253 = scalar_select %p252, %s20, 1
          %p254 = scmp.lt.s32.totalorder %s251, 7
          %s255 = scalar_select %p254, %s251, 7
          %s256 = smul.addr %s253, 8
          %s257 = sadd.s32 %s255, %s256
          %s258 = scalar_lea.vmem %s1, %s257
          %s259 = smul.u32 %s21, 2
          %s260 = sadd.s32 %s259, %s22
          %s261 = smul.u32 2, %s260
        $region28: #{tpu_custom_call.1} parent=19 // pred_fallthru
          _
        // Predicated region
        $region29: #{tpu_custom_call.1} parent=19 // pred_check
          %p262 = pneg %p120
        $region30: #{tpu_custom_call.1} parent=19 // pred_check_branch
          %264 = sbr.rel (%p262) target = $region32
        $region31: #{tpu_custom_call.1} parent=19 // pred_region
          %s265 = smul.u32 %s21, 2
          %s266 = sadd.s32 %s265, %s22
          %s267 = smul.u32 32, %s266
          %p268 = scmp.lt.s32.totalorder %s20, 1
          %s269 = scalar_select %p268, %s20, 1
          %p270 = scmp.lt.s32.totalorder %s267, 127
          %s271 = scalar_select %p270, %s267, 127
          %s272 = smul.addr %s269, 128
          %s273 = sadd.s32 %s271, %s272
          %s274 = smul.addr %s273, 4
          %s275 = scalar_lea.vmem %s2, %s274
          %s276 = smul.u32 %s21, 2
          %s277 = sadd.s32 %s276, %s22
          %s278 = smul.u32 32, %s277
        $region32: #{tpu_custom_call.1} parent=19 // pred_fallthru
          _
      $region20: #{tpu_custom_call.1} parent=5 // pred_fallthru
        _
      %p279 = scmp.le.s32.totalorder 1, %s13
      %p280 = scmp.lt.s32.totalorder %s13, 9
      %p281 = pnand %p279, %p280
      %p282 = pneg %p281
      // Predicated region
      $region33: #{tpu_custom_call.1} parent=5 // pred_check
        _
      $region34: #{tpu_custom_call.1} parent=5 // pred_check_branch
        %284 = sbr.rel (%p281) target = $region36
      $region35: #{tpu_custom_call.1} parent=5 // pred_region
        %s285 = ssub.s32 %s13, 1
        // Predicated region
        $region37: #{tpu_custom_call.1} parent=35 // pred_check
          %p286 = pneg %p147
        $region38: #{tpu_custom_call.1} parent=35 // pred_check_branch
          %288 = sbr.rel (%p286) target = $region40
        $region39: #{tpu_custom_call.1} parent=35 // pred_region
          %289 = dma.done [#allocation3], 16
        $region40: #{tpu_custom_call.1} parent=35 // pred_fallthru
          _
        %290 = sfence
        %s291 = smul.u32 %s24, 2
        %s292 = sadd.s32 %s291, %s25
        %s293 = smul.u32 2, %s292
        %p294 = scmp.lt.s32.totalorder %s293, 7
        %s295 = scalar_select %p294, %s293, 7
        %s296 = smul.addr %s295, 4
        %s297 = scalar_lea.vmem %s0, %s296
        %p298 = pneg %p62
        %p299 = pneg %p59
        %s300 = smul.u32 %s24, 2
        %s301 = sadd.s32 %s300, %s25
        %s302 = smul.u32 2, %s301
        %p303 = scmp.lt.s32.totalorder %s23, 1
        %s304 = scalar_select %p303, %s23, 1
        %p305 = scmp.lt.s32.totalorder %s302, 7
        %s306 = scalar_select %p305, %s302, 7
        %s307 = smul.addr %s304, 8
        %s308 = sadd.s32 %s306, %s307
        %s309 = scalar_lea.vmem %s1, %s308
        %p310 = pneg %p94
        %p311 = pneg %p91
        %s312 = smul.u32 %s24, 2
        %s313 = sadd.s32 %s312, %s25
        %s314 = smul.u32 32, %s313
        %p315 = scmp.lt.s32.totalorder %s23, 1
        %s316 = scalar_select %p315, %s23, 1
        %p317 = scmp.lt.s32.totalorder %s314, 127
        %s318 = scalar_select %p317, %s314, 127
        %s319 = smul.addr %s316, 128
        %s320 = sadd.s32 %s318, %s319
        %s321 = smul.addr %s320, 4
        %s322 = scalar_lea.vmem %s2, %s321
        %p323 = pneg %p126
        %p324 = pneg %p123
        %p325 = pneg %p147
        %p326 = pneg %p144
        %p327 = pneg %p175
        %p328 = pneg %p172
        %p329 = scmp.lt.s32.totalorder %s23, 1
        %s330 = scalar_select %p329, %s23, 1
        %p331 = scmp.lt.s32.totalorder %s24, 1
        %s332 = scalar_select %p331, %s24, 1
        %s333 = smul.addr %s332, 32
        %s334 = smul.addr %s330, 64
        %s335 = sadd.s32 %s333, %s334
        %s336 = smul.addr %s335, 8
        %s337 = scalar_lea.vmem %s4, %s336
        %p338 = pneg %p203
        %p339 = pneg %p200
        %p340 = scmp.lt.s32.totalorder %s23, 1
        %s341 = scalar_select %p340, %s23, 1
        %p342 = scmp.lt.s32.totalorder %s24, 1
        %s343 = scalar_select %p342, %s24, 1
        %s344 = smul.addr %s343, 32
        %s345 = smul.addr %s341, 64
        %s346 = sadd.s32 %s344, %s345
        %s347 = smul.addr %s346, 8
        %s348 = scalar_lea.vmem %s5, %s347
        %s349 = smul.u32 %s24, 2
        %s350 = sadd.s32 %s349, %s25
        %s351 = smul.u32 2, %s350
        %p352 = scmp.lt.s32.totalorder %s351, 7
        %s353 = scalar_select %p352, %s351, 7
        %s354 = smul.addr %s353, 4
        %s355 = scalar_lea.vmem %s0, %s354
        %s356 = smul.u32 %s24, 2
        %s357 = sadd.s32 %s356, %s25
        %s358 = smul.u32 2, %s357
        %s359 = smul.u32 %s24, 2
        %s360 = sadd.s32 %s359, %s25
        %s361 = smul.u32 2, %s360
        %p362 = scmp.lt.s32.totalorder %s23, 1
        %s363 = scalar_select %p362, %s23, 1
        %p364 = scmp.lt.s32.totalorder %s361, 7
        %s365 = scalar_select %p364, %s361, 7
        %s366 = smul.addr %s363, 8
        %s367 = sadd.s32 %s365, %s366
        %s368 = scalar_lea.vmem %s1, %s367
        %s369 = smul.u32 %s24, 2
        %s370 = sadd.s32 %s369, %s25
        %s371 = smul.u32 2, %s370
        %s372 = smul.u32 %s24, 2
        %s373 = sadd.s32 %s372, %s25
        %s374 = smul.u32 32, %s373
        %p375 = scmp.lt.s32.totalorder %s23, 1
        %s376 = scalar_select %p375, %s23, 1
        %p377 = scmp.lt.s32.totalorder %s374, 127
        %s378 = scalar_select %p377, %s374, 127
        %s379 = smul.addr %s376, 128
        %s380 = sadd.s32 %s378, %s379
        %s381 = smul.addr %s380, 4
        %s382 = scalar_lea.vmem %s2, %s381
        %s383 = smul.u32 %s24, 2
        %s384 = sadd.s32 %s383, %s25
        %s385 = smul.u32 32, %s384
        %p386 = scmp.lt.s32.totalorder %s23, 1
        %s387 = scalar_select %p386, %s23, 1
        %p388 = scmp.lt.s32.totalorder %s24, 1
        %s389 = scalar_select %p388, %s24, 1
        %s390 = smul.addr %s389, 32
        %s391 = smul.addr %s387, 64
        %s392 = sadd.s32 %s390, %s391
        %s393 = smul.addr %s392, 8
        %s394 = scalar_lea.vmem %s4, %s393
        %p395 = scmp.lt.s32.totalorder %s23, 1
        %s396 = scalar_select %p395, %s23, 1
        %p397 = scmp.lt.s32.totalorder %s24, 1
        %s398 = scalar_select %p397, %s24, 1
        %s399 = smul.addr %s398, 32
        %s400 = smul.addr %s396, 64
        %s401 = sadd.s32 %s399, %s400
        %s402 = smul.addr %s401, 8
        %s403 = scalar_lea.vmem %s5, %s402
        %p405 = scmp.eq.s32.totalorder %s25, 0
        // Predicated region
        $region41: #{tpu_custom_call.1} parent=35 // pred_check
          %p406 = pneg %p405
        $region42: #{tpu_custom_call.1} parent=35 // pred_check_branch
          %408 = sbr.rel (%p406) target = $region44
        $region43: #{tpu_custom_call.1} parent=35 // pred_region
          %vm409 = vcmask 31744
          %410 = vst.msk [vmem:[%s394] sm:$0xff] %vm409, 0.0
          %411 = vst.msk [vmem:[%s394 + $0x8] sm:$0xff] %vm409, 0.0
          %412 = vst.msk [vmem:[%s394 + $0x10] sm:$0xff] %vm409, 0.0
          %413 = vst.msk [vmem:[%s394 + $0x18] sm:$0xff] %vm409, 0.0
          %414 = vst.msk [vmem:[%s394 + $0x20] sm:$0xff] %vm409, 0.0
          %415 = vst.msk [vmem:[%s394 + $0x28] sm:$0xff] %vm409, 0.0
          %416 = vst.msk [vmem:[%s394 + $0x30] sm:$0xff] %vm409, 0.0
          %417 = vst.msk [vmem:[%s394 + $0x38] sm:$0xff] %vm409, 0.0
          %418 = vst.msk [vmem:[%s394 + $0x40] sm:$0xff] %vm409, 0.0
          %419 = vst.msk [vmem:[%s394 + $0x48] sm:$0xff] %vm409, 0.0
          %420 = vst.msk [vmem:[%s394 + $0x50] sm:$0xff] %vm409, 0.0
          %421 = vst.msk [vmem:[%s394 + $0x58] sm:$0xff] %vm409, 0.0
          %422 = vst.msk [vmem:[%s394 + $0x60] sm:$0xff] %vm409, 0.0
          %423 = vst.msk [vmem:[%s394 + $0x68] sm:$0xff] %vm409, 0.0
          %424 = vst.msk [vmem:[%s394 + $0x70] sm:$0xff] %vm409, 0.0
          %425 = vst.msk [vmem:[%s394 + $0x78] sm:$0xff] %vm409, 0.0
          %426 = vst.msk [vmem:[%s394 + $0x80] sm:$0xff] %vm409, 0.0
          %427 = vst.msk [vmem:[%s394 + $0x88] sm:$0xff] %vm409, 0.0
          %428 = vst.msk [vmem:[%s394 + $0x90] sm:$0xff] %vm409, 0.0
          %429 = vst.msk [vmem:[%s394 + $0x98] sm:$0xff] %vm409, 0.0
          %430 = vst.msk [vmem:[%s394 + $0xa0] sm:$0xff] %vm409, 0.0
          %431 = vst.msk [vmem:[%s394 + $0xa8] sm:$0xff] %vm409, 0.0
          %432 = vst.msk [vmem:[%s394 + $0xb0] sm:$0xff] %vm409, 0.0
          %433 = vst.msk [vmem:[%s394 + $0xb8] sm:$0xff] %vm409, 0.0
          %434 = vst.msk [vmem:[%s394 + $0xc0] sm:$0xff] %vm409, 0.0
          %435 = vst.msk [vmem:[%s394 + $0xc8] sm:$0xff] %vm409, 0.0
          %436 = vst.msk [vmem:[%s394 + $0xd0] sm:$0xff] %vm409, 0.0
          %437 = vst.msk [vmem:[%s394 + $0xd8] sm:$0xff] %vm409, 0.0
          %438 = vst.msk [vmem:[%s394 + $0xe0] sm:$0xff] %vm409, 0.0
          %439 = vst.msk [vmem:[%s394 + $0xe8] sm:$0xff] %vm409, 0.0
          %440 = vst.msk [vmem:[%s394 + $0xf0] sm:$0xff] %vm409, 0.0
          %441 = vst.msk [vmem:[%s394 + $0xf8] sm:$0xff] %vm409, 0.0
          %vm442 = vcmask 7168
          %443 = vst.msk [vmem:[%s403] sm:$0xff] %vm442, 0.0
          %444 = vst.msk [vmem:[%s403 + $0x8] sm:$0xff] %vm442, 0.0
          %445 = vst.msk [vmem:[%s403 + $0x10] sm:$0xff] %vm442, 0.0
          %446 = vst.msk [vmem:[%s403 + $0x18] sm:$0xff] %vm442, 0.0
          %447 = vst.msk [vmem:[%s403 + $0x20] sm:$0xff] %vm442, 0.0
          %448 = vst.msk [vmem:[%s403 + $0x28] sm:$0xff] %vm442, 0.0
          %449 = vst.msk [vmem:[%s403 + $0x30] sm:$0xff] %vm442, 0.0
          %450 = vst.msk [vmem:[%s403 + $0x38] sm:$0xff] %vm442, 0.0
          %451 = vst.msk [vmem:[%s403 + $0x40] sm:$0xff] %vm442, 0.0
          %452 = vst.msk [vmem:[%s403 + $0x48] sm:$0xff] %vm442, 0.0
          %453 = vst.msk [vmem:[%s403 + $0x50] sm:$0xff] %vm442, 0.0
          %454 = vst.msk [vmem:[%s403 + $0x58] sm:$0xff] %vm442, 0.0
          %455 = vst.msk [vmem:[%s403 + $0x60] sm:$0xff] %vm442, 0.0
          %456 = vst.msk [vmem:[%s403 + $0x68] sm:$0xff] %vm442, 0.0
          %457 = vst.msk [vmem:[%s403 + $0x70] sm:$0xff] %vm442, 0.0
          %458 = vst.msk [vmem:[%s403 + $0x78] sm:$0xff] %vm442, 0.0
          %459 = vst.msk [vmem:[%s403 + $0x80] sm:$0xff] %vm442, 0.0
          %460 = vst.msk [vmem:[%s403 + $0x88] sm:$0xff] %vm442, 0.0
          %461 = vst.msk [vmem:[%s403 + $0x90] sm:$0xff] %vm442, 0.0
          %462 = vst.msk [vmem:[%s403 + $0x98] sm:$0xff] %vm442, 0.0
          %463 = vst.msk [vmem:[%s403 + $0xa0] sm:$0xff] %vm442, 0.0
          %464 = vst.msk [vmem:[%s403 + $0xa8] sm:$0xff] %vm442, 0.0
          %465 = vst.msk [vmem:[%s403 + $0xb0] sm:$0xff] %vm442, 0.0
          %466 = vst.msk [vmem:[%s403 + $0xb8] sm:$0xff] %vm442, 0.0
          %467 = vst.msk [vmem:[%s403 + $0xc0] sm:$0xff] %vm442, 0.0
          %468 = vst.msk [vmem:[%s403 + $0xc8] sm:$0xff] %vm442, 0.0
          %469 = vst.msk [vmem:[%s403 + $0xd0] sm:$0xff] %vm442, 0.0
          %470 = vst.msk [vmem:[%s403 + $0xd8] sm:$0xff] %vm442, 0.0
          %471 = vst.msk [vmem:[%s403 + $0xe0] sm:$0xff] %vm442, 0.0
          %472 = vst.msk [vmem:[%s403 + $0xe8] sm:$0xff] %vm442, 0.0
          %473 = vst.msk [vmem:[%s403 + $0xf0] sm:$0xff] %vm442, 0.0
          %474 = vst.msk [vmem:[%s403 + $0xf8] sm:$0xff] %vm442, 0.0
        $region44: #{tpu_custom_call.1} parent=35 // pred_fallthru
          _
        %s475 = smul.u32 %s23, 16
        %s476 = sld [smem:[#allocation2 + %s475]]
        %s477 = sadd.s32 %s475, 1
        %s478 = sld [smem:[#allocation2 + %s477]]
        %s479 = sadd.s32 %s475, 2
        %s480 = sld [smem:[#allocation2 + %s479]]
        %s481 = sadd.s32 %s475, 3
        %s482 = sld [smem:[#allocation2 + %s481]]
        %s483 = sadd.s32 %s475, 4
        %s484 = sld [smem:[#allocation2 + %s483]]
        %s485 = sadd.s32 %s475, 5
        %s486 = sld [smem:[#allocation2 + %s485]]
        %s487 = sadd.s32 %s475, 6
        %s488 = sld [smem:[#allocation2 + %s487]]
        %s489 = sadd.s32 %s475, 7
        %s490 = sld [smem:[#allocation2 + %s489]]
        %s491 = sadd.s32 %s475, 8
        %s492 = sld [smem:[#allocation2 + %s491]]
        %s493 = sadd.s32 %s475, 9
        %s494 = sld [smem:[#allocation2 + %s493]]
        %s495 = sadd.s32 %s475, 10
        %s496 = sld [smem:[#allocation2 + %s495]]
        %s497 = sadd.s32 %s475, 11
        %s498 = sld [smem:[#allocation2 + %s497]]
        %v499 = vld [vmem:[%s368] sm:$0x1]
        %v500 = vld [vmem:[%s355] sm:$0x1]
        %v501 = vld [vmem:[%s355 + $0x1] sm:$0x1]
        %v502 = vld [vmem:[%s355 + $0x2] sm:$0x1]
        %v503 = vmul.f32 %v500, %v499
        %v504 = vmul.f32 %v501, %v499
        %v505 = vmul.f32 %v502, %v499
        %v506 = vstv %s476
        %v507 = vmul.f32 %v506, %v503
        %v508 = vstv %s478
        %v509 = vmul.f32 %v508, %v504
        %v510 = vadd.f32 %v507, %v509
        %v511 = vstv %s480
        %v512 = vmul.f32 %v511, %v505
        %v513 = vadd.f32 %v510, %v512
        %v514 = vstv %s482
        %v515 = vadd.f32 %v513, %v514
        %v516 = vstv %s484
        %v517 = vmul.f32 %v516, %v503
        %v518 = vstv %s486
        %v519 = vmul.f32 %v518, %v504
        %v520 = vadd.f32 %v517, %v519
        %v521 = vstv %s488
        %v522 = vmul.f32 %v521, %v505
        %v523 = vadd.f32 %v520, %v522
        %v524 = vstv %s490
        %v525 = vadd.f32 %v523, %v524
        %v526 = vstv %s492
        %v527 = vmul.f32 %v526, %v503
        %v528 = vstv %s494
        %v529 = vmul.f32 %v528, %v504
        %v530 = vadd.f32 %v527, %v529
        %v531 = vstv %s496
        %v532 = vmul.f32 %v531, %v505
        %v533 = vadd.f32 %v530, %v532
        %v534 = vstv %s498
        %v535 = vadd.f32 %v533, %v534
        %v536 = vsub.f32 %v515, -2.0
        %v537 = vmul.f32 %v536, 2.0
        %v538 = vfloor.f32 %v537
        %v539 = vcvt.f32.s32.to.zero.pseudo %v538
        %v540 = vsub.f32 %v525, -2.0
        %v541 = vmul.f32 %v540, 2.0
        %v542 = vfloor.f32 %v541
        %v543 = vcvt.f32.s32.to.zero.pseudo %v542
        %v544 = vsub.f32 %v535, -0.5
        %v545 = vmul.f32 %v544, 2.0
        %v546 = vfloor.f32 %v545
        %v547 = vcvt.f32.s32.to.zero.pseudo %v546
        %vm548 = vcmp.gt.f32.partialorder %v499, 0.0
        %vm549 = vcmp.ge.s32.totalorder %v539, 0
        %vm550 = vmand %vm548, %vm549
        %vm551 = vcmp.lt.s32.totalorder %v539, 8
        %vm552 = vmand %vm550, %vm551
        %vm553 = vcmp.ge.s32.totalorder %v543, 0
        %vm554 = vmand %vm552, %vm553
        %vm555 = vcmp.lt.s32.totalorder %v543, 8
        %vm556 = vmand %vm554, %vm555
        %vm557 = vcmp.ge.s32.totalorder %v547, 0
        %vm558 = vmand %vm556, %vm557
        %vm559 = vcmp.lt.s32.totalorder %v547, 4
        %vm560 = vmand %vm558, %vm559
        %v561 = vmul.u32 %v539, 32
        %v562 = vmul.u32 %v543, 4
        %v563 = vadd.s32 %v561, %v562
        %v564 = vadd.s32 %v563, %v547
        %v565 = vsel %vm560, %v564, 4294967295
        %v566 = vlaneseq
        %v567 = vshrl.u32 %v566, 7
        %v568 = vadd.s32 %v567, 8
        %v569 = vadd.s32 %v567, 16
        %v570 = vadd.s32 %v567, 24
        %v571 = vadd.s32 %v567, 32
        %v572 = vadd.s32 %v567, 40
        %v573 = vadd.s32 %v567, 48
        %v574 = vadd.s32 %v567, 56
        %v575 = vadd.s32 %v567, 64
        %v576 = vadd.s32 %v567, 72
        %v577 = vadd.s32 %v567, 80
        %v578 = vadd.s32 %v567, 88
        %v579 = vadd.s32 %v567, 96
        %v580 = vadd.s32 %v567, 104
        %v581 = vadd.s32 %v567, 112
        %v582 = vadd.s32 %v567, 120
        %v583 = vadd.s32 %v567, 128
        %v584 = vadd.s32 %v567, 136
        %v585 = vadd.s32 %v567, 144
        %v586 = vadd.s32 %v567, 152
        %v587 = vadd.s32 %v567, 160
        %v588 = vadd.s32 %v567, 168
        %v589 = vadd.s32 %v567, 176
        %v590 = vadd.s32 %v567, 184
        %v591 = vadd.s32 %v567, 192
        %v592 = vadd.s32 %v567, 200
        %v593 = vadd.s32 %v567, 208
        %v594 = vadd.s32 %v567, 216
        %v595 = vadd.s32 %v567, 224
        %v596 = vadd.s32 %v567, 232
        %v597 = vadd.s32 %v567, 240
        %v598 = vadd.s32 %v567, 248
        %v599 = vlaneseq
        %v600 = vshrl.u32 %v599, 7
        %v601 = vsub.s32 0, %v600
        %v602 = vrot.slane %v565, %v601
        %vm603 = vcmp.eq.s32.totalorder %v567, %v602
        %vm604 = vcmp.eq.s32.totalorder %v568, %v602
        %vm605 = vcmp.eq.s32.totalorder %v569, %v602
        %vm606 = vcmp.eq.s32.totalorder %v570, %v602
        %vm607 = vcmp.eq.s32.totalorder %v571, %v602
        %vm608 = vcmp.eq.s32.totalorder %v572, %v602
        %vm609 = vcmp.eq.s32.totalorder %v573, %v602
        %vm610 = vcmp.eq.s32.totalorder %v574, %v602
        %vm611 = vcmp.eq.s32.totalorder %v575, %v602
        %vm612 = vcmp.eq.s32.totalorder %v576, %v602
        %vm613 = vcmp.eq.s32.totalorder %v577, %v602
        %vm614 = vcmp.eq.s32.totalorder %v578, %v602
        %vm615 = vcmp.eq.s32.totalorder %v579, %v602
        %vm616 = vcmp.eq.s32.totalorder %v580, %v602
        %vm617 = vcmp.eq.s32.totalorder %v581, %v602
        %vm618 = vcmp.eq.s32.totalorder %v582, %v602
        %vm619 = vcmp.eq.s32.totalorder %v583, %v602
        %vm620 = vcmp.eq.s32.totalorder %v584, %v602
        %vm621 = vcmp.eq.s32.totalorder %v585, %v602
        %vm622 = vcmp.eq.s32.totalorder %v586, %v602
        %vm623 = vcmp.eq.s32.totalorder %v587, %v602
        %vm624 = vcmp.eq.s32.totalorder %v588, %v602
        %vm625 = vcmp.eq.s32.totalorder %v589, %v602
        %vm626 = vcmp.eq.s32.totalorder %v590, %v602
        %vm627 = vcmp.eq.s32.totalorder %v591, %v602
        %vm628 = vcmp.eq.s32.totalorder %v592, %v602
        %vm629 = vcmp.eq.s32.totalorder %v593, %v602
        %vm630 = vcmp.eq.s32.totalorder %v594, %v602
        %vm631 = vcmp.eq.s32.totalorder %v595, %v602
        %vm632 = vcmp.eq.s32.totalorder %v596, %v602
        %vm633 = vcmp.eq.s32.totalorder %v597, %v602
        %vm634 = vcmp.eq.s32.totalorder %v598, %v602
        %v635 = vsel %vm603, 1, 0
        %v636 = vsel %vm604, 1, 0
        %v637 = vsel %vm605, 1, 0
        %v638 = vsel %vm606, 1, 0
        %v639 = vsel %vm607, 1, 0
        %v640 = vsel %vm608, 1, 0
        %v641 = vsel %vm609, 1, 0
        %v642 = vsel %vm610, 1, 0
        %v643 = vsel %vm611, 1, 0
        %v644 = vsel %vm612, 1, 0
        %v645 = vsel %vm613, 1, 0
        %v646 = vsel %vm614, 1, 0
        %v647 = vsel %vm615, 1, 0
        %v648 = vsel %vm616, 1, 0
        %v649 = vsel %vm617, 1, 0
        %v650 = vsel %vm618, 1, 0
        %v651 = vsel %vm619, 1, 0
        %v652 = vsel %vm620, 1, 0
        %v653 = vsel %vm621, 1, 0
        %v654 = vsel %vm622, 1, 0
        %v655 = vsel %vm623, 1, 0
        %v656 = vsel %vm624, 1, 0
        %v657 = vsel %vm625, 1, 0
        %v658 = vsel %vm626, 1, 0
        %v659 = vsel %vm627, 1, 0
        %v660 = vsel %vm628, 1, 0
        %v661 = vsel %vm629, 1, 0
        %v662 = vsel %vm630, 1, 0
        %v663 = vsel %vm631, 1, 0
        %v664 = vsel %vm632, 1, 0
        %v665 = vsel %vm633, 1, 0
        %v666 = vsel %vm634, 1, 0
        %v667 = vcvt.s32.f32 %v635
        %v668 = vcvt.s32.f32 %v636
        %v669 = vcvt.s32.f32 %v637
        %v670 = vcvt.s32.f32 %v638
        %v671 = vcvt.s32.f32 %v639
        %v672 = vcvt.s32.f32 %v640
        %v673 = vcvt.s32.f32 %v641
        %v674 = vcvt.s32.f32 %v642
        %v675 = vcvt.s32.f32 %v643
        %v676 = vcvt.s32.f32 %v644
        %v677 = vcvt.s32.f32 %v645
        %v678 = vcvt.s32.f32 %v646
        %v679 = vcvt.s32.f32 %v647
        %v680 = vcvt.s32.f32 %v648
        %v681 = vcvt.s32.f32 %v649
        %v682 = vcvt.s32.f32 %v650
        %v683 = vcvt.s32.f32 %v651
        %v684 = vcvt.s32.f32 %v652
        %v685 = vcvt.s32.f32 %v653
        %v686 = vcvt.s32.f32 %v654
        %v687 = vcvt.s32.f32 %v655
        %v688 = vcvt.s32.f32 %v656
        %v689 = vcvt.s32.f32 %v657
        %v690 = vcvt.s32.f32 %v658
        %v691 = vcvt.s32.f32 %v659
        %v692 = vcvt.s32.f32 %v660
        %v693 = vcvt.s32.f32 %v661
        %v694 = vcvt.s32.f32 %v662
        %v695 = vcvt.s32.f32 %v663
        %v696 = vcvt.s32.f32 %v664
        %v697 = vcvt.s32.f32 %v665
        %v698 = vcvt.s32.f32 %v666
        %v699 = vpack.c.bf16 %v668, %v667
        %v700 = vpack.c.bf16 %v670, %v669
        %v701 = vpack.c.bf16 %v672, %v671
        %v702 = vpack.c.bf16 %v674, %v673
        %v703 = vpack.c.bf16 %v676, %v675
        %v704 = vpack.c.bf16 %v678, %v677
        %v705 = vpack.c.bf16 %v680, %v679
        %v706 = vpack.c.bf16 %v682, %v681
        %v707 = vpack.c.bf16 %v684, %v683
        %v708 = vpack.c.bf16 %v686, %v685
        %v709 = vpack.c.bf16 %v688, %v687
        %v710 = vpack.c.bf16 %v690, %v689
        %v711 = vpack.c.bf16 %v692, %v691
        %v712 = vpack.c.bf16 %v694, %v693
        %v713 = vpack.c.bf16 %v696, %v695
        %v714 = vpack.c.bf16 %v698, %v697
        %v715 = vld [vmem:[%s382] sm:$0xf]
        %v716 = vld [vmem:[%s382 + $0x4] sm:$0xf]
        %v717 = vld [vmem:[%s382 + $0x8] sm:$0xf]
        %v718 = vld [vmem:[%s382 + $0xc] sm:$0xf]
        %v719 = vld [vmem:[%s382 + $0x10] sm:$0xf]
        %v720 = vld [vmem:[%s382 + $0x14] sm:$0xf]
        %v721 = vld [vmem:[%s382 + $0x18] sm:$0xf]
        %v722 = vld [vmem:[%s382 + $0x1c] sm:$0xf]
        %v723 = vld [vmem:[%s382 + $0x20] sm:$0xf]
        %v724 = vld [vmem:[%s382 + $0x24] sm:$0xf]
        %v725 = vld [vmem:[%s382 + $0x28] sm:$0xf]
        %v726 = vld [vmem:[%s382 + $0x2c] sm:$0xf]
        %v727 = vld [vmem:[%s382 + $0x30] sm:$0xf]
        %v728 = vld [vmem:[%s382 + $0x34] sm:$0xf]
        %v729 = vld [vmem:[%s382 + $0x38] sm:$0xf]
        %v730 = vld [vmem:[%s382 + $0x3c] sm:$0xf]
        %v731 = vld [vmem:[%s394] sm:$0xff]
        %v732 = vld [vmem:[%s394 + $0x8] sm:$0xff]
        %v733 = vld [vmem:[%s394 + $0x10] sm:$0xff]
        %v734 = vld [vmem:[%s394 + $0x18] sm:$0xff]
        %v735 = vld [vmem:[%s394 + $0x20] sm:$0xff]
        %v736 = vld [vmem:[%s394 + $0x28] sm:$0xff]
        %v737 = vld [vmem:[%s394 + $0x30] sm:$0xff]
        %v738 = vld [vmem:[%s394 + $0x38] sm:$0xff]
        %v739 = vld [vmem:[%s394 + $0x40] sm:$0xff]
        %v740 = vld [vmem:[%s394 + $0x48] sm:$0xff]
        %v741 = vld [vmem:[%s394 + $0x50] sm:$0xff]
        %v742 = vld [vmem:[%s394 + $0x58] sm:$0xff]
        %v743 = vld [vmem:[%s394 + $0x60] sm:$0xff]
        %v744 = vld [vmem:[%s394 + $0x68] sm:$0xff]
        %v745 = vld [vmem:[%s394 + $0x70] sm:$0xff]
        %v746 = vld [vmem:[%s394 + $0x78] sm:$0xff]
        %v747 = vld [vmem:[%s394 + $0x80] sm:$0xff]
        %v748 = vld [vmem:[%s394 + $0x88] sm:$0xff]
        %v749 = vld [vmem:[%s394 + $0x90] sm:$0xff]
        %v750 = vld [vmem:[%s394 + $0x98] sm:$0xff]
        %v751 = vld [vmem:[%s394 + $0xa0] sm:$0xff]
        %v752 = vld [vmem:[%s394 + $0xa8] sm:$0xff]
        %v753 = vld [vmem:[%s394 + $0xb0] sm:$0xff]
        %v754 = vld [vmem:[%s394 + $0xb8] sm:$0xff]
        %v755 = vld [vmem:[%s394 + $0xc0] sm:$0xff]
        %v756 = vld [vmem:[%s394 + $0xc8] sm:$0xff]
        %v757 = vld [vmem:[%s394 + $0xd0] sm:$0xff]
        %v758 = vld [vmem:[%s394 + $0xd8] sm:$0xff]
        %v759 = vld [vmem:[%s394 + $0xe0] sm:$0xff]
        %v760 = vld [vmem:[%s394 + $0xe8] sm:$0xff]
        %v761 = vld [vmem:[%s394 + $0xf0] sm:$0xff]
        %v762 = vld [vmem:[%s394 + $0xf8] sm:$0xff]
        %v779 = vunpack.c.l.b16 %v715
        %v780 = vunpack.c.l.b16 %v716
        %v781 = vunpack.c.l.b16 %v717
        %v782 = vunpack.c.l.b16 %v718
        %v783 = vunpack.c.l.b16 %v719
        %v784 = vunpack.c.l.b16 %v720
        %v785 = vunpack.c.l.b16 %v721
        %v786 = vunpack.c.l.b16 %v722
        %v787 = vunpack.c.l.b16 %v723
        %v788 = vunpack.c.l.b16 %v724
        %v789 = vunpack.c.l.b16 %v725
        %v790 = vunpack.c.l.b16 %v726
        %v791 = vunpack.c.l.b16 %v727
        %v792 = vunpack.c.l.b16 %v728
        %v793 = vunpack.c.l.b16 %v729
        %v794 = vunpack.c.l.b16 %v730
        %v795 = vpack.c.b16 %v780, %v779
        %v796 = vpack.c.b16 %v782, %v781
        %v797 = vpack.c.b16 %v784, %v783
        %v798 = vpack.c.b16 %v786, %v785
        %v799 = vpack.c.b16 %v788, %v787
        %v800 = vpack.c.b16 %v790, %v789
        %v801 = vpack.c.b16 %v792, %v791
        %v802 = vpack.c.b16 %v794, %v793
        %811 = vmatprep.subr.bf16.mxu0 0
        %812 = vmatpush1.bf16.msra.mxu0 %v795
        %813 = vmatprep.subr.bf16.mxu0 0
        %814 = vmatpush1.bf16.msra.mxu0 %v796
        %815 = vmatprep.subr.bf16.mxu0 0
        %816 = vmatpush1.bf16.msra.mxu0 %v797
        %817 = vmatprep.subr.bf16.mxu0 0
        %818 = vmatpush1.bf16.msra.mxu0 %v798
        %819 = vmatprep.subr.bf16.mxu0 0
        %820 = vmatpush1.bf16.msra.mxu0 %v799
        %821 = vmatprep.subr.bf16.mxu0 0
        %822 = vmatpush1.bf16.msra.mxu0 %v800
        %823 = vmatprep.subr.bf16.mxu0 0
        %824 = vmatpush1.bf16.msra.mxu0 %v801
        %825 = vmatprep.subr.bf16.mxu0 0
        %826 = vmatpush1.bf16.msra.mxu0 %v802
        %827 = vmatprep.subr.bf16.mxu0 0
        %828 = vmatpush1.bf16.msra.mxu0 0
        %829 = vmatprep.subr.bf16.mxu0 0
        %830 = vmatpush1.bf16.msra.mxu0 0
        %831 = vmatprep.subr.bf16.mxu0 0
        %832 = vmatpush1.bf16.msra.mxu0 0
        %833 = vmatprep.subr.bf16.mxu0 0
        %834 = vmatpush1.bf16.msra.mxu0 0
        %835 = vmatprep.subr.bf16.mxu0 0
        %836 = vmatpush1.bf16.msra.mxu0 0
        %837 = vmatprep.subr.bf16.mxu0 0
        %838 = vmatpush1.bf16.msra.mxu0 0
        %839 = vmatprep.subr.bf16.mxu0 0
        %840 = vmatpush1.bf16.msra.mxu0 0
        %841 = vmatprep.subr.bf16.mxu0 0
        %842 = vmatpush1.bf16.msra.mxu0 0
        %843 = vmatprep.mubr.bf16.mxu0 0
        %844 = vmatmul.mubr.bf16.gmra.mrb[0].mxu0 %v699
        %v845 = vpop.f32.mrb[0].mxu0
        %v846 = vadd.f32 0.0, %v845
        %v847 = vpop.f32.mrb[0].mxu0
        %v848 = vpop.f32.mrb[0].mxu0
        %v849 = vadd.f32 0.0, %v848
        %v850 = vpop.f32.mrb[0].mxu0
        %851 = vmatprep.mubr.bf16.mxu0 0
        %852 = vmatmul.mubr.bf16.gmra.mrb[0].mxu0 %v700
        %v853 = vpop.f32.mrb[0].mxu0
        %v854 = vadd.f32 0.0, %v853
        %v855 = vpop.f32.mrb[0].mxu0
        %v856 = vpop.f32.mrb[0].mxu0
        %v857 = vadd.f32 0.0, %v856
        %v858 = vpop.f32.mrb[0].mxu0
        %859 = vmatprep.mubr.bf16.mxu0 0
        %860 = vmatmul.mubr.bf16.gmra.mrb[0].mxu0 %v701
        %v861 = vpop.f32.mrb[0].mxu0
        %v862 = vadd.f32 0.0, %v861
        %v863 = vpop.f32.mrb[0].mxu0
        %v864 = vpop.f32.mrb[0].mxu0
        %v865 = vadd.f32 0.0, %v864
        %v866 = vpop.f32.mrb[0].mxu0
        %867 = vmatprep.mubr.bf16.mxu0 0
        %868 = vmatmul.mubr.bf16.gmra.mrb[0].mxu0 %v702
        %v869 = vpop.f32.mrb[0].mxu0
        %v870 = vadd.f32 0.0, %v869
        %v871 = vpop.f32.mrb[0].mxu0
        %v872 = vpop.f32.mrb[0].mxu0
        %v873 = vadd.f32 0.0, %v872
        %v874 = vpop.f32.mrb[0].mxu0
        %875 = vmatprep.mubr.bf16.mxu0 0
        %876 = vmatmul.mubr.bf16.gmra.mrb[0].mxu0 %v703
        %v877 = vpop.f32.mrb[0].mxu0
        %v878 = vadd.f32 0.0, %v877
        %v879 = vpop.f32.mrb[0].mxu0
        %v880 = vpop.f32.mrb[0].mxu0
        %v881 = vadd.f32 0.0, %v880
        %v882 = vpop.f32.mrb[0].mxu0
        %883 = vmatprep.mubr.bf16.mxu0 0
        %884 = vmatmul.mubr.bf16.gmra.mrb[0].mxu0 %v704
        %v885 = vpop.f32.mrb[0].mxu0
        %v886 = vadd.f32 0.0, %v885
        %v887 = vpop.f32.mrb[0].mxu0
        %v888 = vpop.f32.mrb[0].mxu0
        %v889 = vadd.f32 0.0, %v888
        %v890 = vpop.f32.mrb[0].mxu0
        %891 = vmatprep.mubr.bf16.mxu0 0
        %892 = vmatmul.mubr.bf16.gmra.mrb[0].mxu0 %v705
        %v893 = vpop.f32.mrb[0].mxu0
        %v894 = vadd.f32 0.0, %v893
        %v895 = vpop.f32.mrb[0].mxu0
        %v896 = vpop.f32.mrb[0].mxu0
        %v897 = vadd.f32 0.0, %v896
        %v898 = vpop.f32.mrb[0].mxu0
        %899 = vmatprep.mubr.bf16.mxu0 0
        %900 = vmatmul.mubr.bf16.gmra.mrb[0].mxu0 %v706
        %v901 = vpop.f32.mrb[0].mxu0
        %v902 = vadd.f32 0.0, %v901
        %v903 = vpop.f32.mrb[0].mxu0
        %v904 = vpop.f32.mrb[0].mxu0
        %v905 = vadd.f32 0.0, %v904
        %v906 = vpop.f32.mrb[0].mxu0
        %907 = vmatprep.mubr.bf16.mxu0 0
        %908 = vmatmul.mubr.bf16.gmra.mrb[0].mxu0 %v707
        %v909 = vpop.f32.mrb[0].mxu0
        %v910 = vadd.f32 0.0, %v909
        %v911 = vpop.f32.mrb[0].mxu0
        %v912 = vpop.f32.mrb[0].mxu0
        %v913 = vadd.f32 0.0, %v912
        %v914 = vpop.f32.mrb[0].mxu0
        %915 = vmatprep.mubr.bf16.mxu0 0
        %916 = vmatmul.mubr.bf16.gmra.mrb[0].mxu0 %v708
        %v917 = vpop.f32.mrb[0].mxu0
        %v918 = vadd.f32 0.0, %v917
        %v919 = vpop.f32.mrb[0].mxu0
        %v920 = vpop.f32.mrb[0].mxu0
        %v921 = vadd.f32 0.0, %v920
        %v922 = vpop.f32.mrb[0].mxu0
        %923 = vmatprep.mubr.bf16.mxu0 0
        %924 = vmatmul.mubr.bf16.gmra.mrb[0].mxu0 %v709
        %v925 = vpop.f32.mrb[0].mxu0
        %v926 = vadd.f32 0.0, %v925
        %v927 = vpop.f32.mrb[0].mxu0
        %v928 = vpop.f32.mrb[0].mxu0
        %v929 = vadd.f32 0.0, %v928
        %v930 = vpop.f32.mrb[0].mxu0
        %931 = vmatprep.mubr.bf16.mxu0 0
        %932 = vmatmul.mubr.bf16.gmra.mrb[0].mxu0 %v710
        %v933 = vpop.f32.mrb[0].mxu0
        %v934 = vadd.f32 0.0, %v933
        %v935 = vpop.f32.mrb[0].mxu0
        %v936 = vpop.f32.mrb[0].mxu0
        %v937 = vadd.f32 0.0, %v936
        %v938 = vpop.f32.mrb[0].mxu0
        %939 = vmatprep.mubr.bf16.mxu0 0
        %940 = vmatmul.mubr.bf16.gmra.mrb[0].mxu0 %v711
        %v941 = vpop.f32.mrb[0].mxu0
        %v942 = vadd.f32 0.0, %v941
        %v943 = vpop.f32.mrb[0].mxu0
        %v944 = vpop.f32.mrb[0].mxu0
        %v945 = vadd.f32 0.0, %v944
        %v946 = vpop.f32.mrb[0].mxu0
        %947 = vmatprep.mubr.bf16.mxu0 0
        %948 = vmatmul.mubr.bf16.gmra.mrb[0].mxu0 %v712
        %v949 = vpop.f32.mrb[0].mxu0
        %v950 = vadd.f32 0.0, %v949
        %v951 = vpop.f32.mrb[0].mxu0
        %v952 = vpop.f32.mrb[0].mxu0
        %v953 = vadd.f32 0.0, %v952
        %v954 = vpop.f32.mrb[0].mxu0
        %955 = vmatprep.mubr.bf16.mxu0 0
        %956 = vmatmul.mubr.bf16.gmra.mrb[0].mxu0 %v713
        %v957 = vpop.f32.mrb[0].mxu0
        %v958 = vadd.f32 0.0, %v957
        %v959 = vpop.f32.mrb[0].mxu0
        %v960 = vpop.f32.mrb[0].mxu0
        %v961 = vadd.f32 0.0, %v960
        %v962 = vpop.f32.mrb[0].mxu0
        %963 = vmatprep.mubr.bf16.mxu0 0
        %964 = vmatmul.mubr.bf16.gmra.mrb[0].mxu0 %v714
        %v965 = vpop.f32.mrb[0].mxu0
        %v966 = vadd.f32 0.0, %v965
        %v967 = vpop.f32.mrb[0].mxu0
        %v968 = vpop.f32.mrb[0].mxu0
        %v969 = vadd.f32 0.0, %v968
        %v970 = vpop.f32.mrb[0].mxu0
        %971 = vdwg.mxu0
        %v972 = vadd.f32 %v731, %v846
        %v973 = vadd.f32 %v732, %v849
        %v974 = vadd.f32 %v733, %v854
        %v975 = vadd.f32 %v734, %v857
        %v976 = vadd.f32 %v735, %v862
        %v977 = vadd.f32 %v736, %v865
        %v978 = vadd.f32 %v737, %v870
        %v979 = vadd.f32 %v738, %v873
        %v980 = vadd.f32 %v739, %v878
        %v981 = vadd.f32 %v740, %v881
        %v982 = vadd.f32 %v741, %v886
        %v983 = vadd.f32 %v742, %v889
        %v984 = vadd.f32 %v743, %v894
        %v985 = vadd.f32 %v744, %v897
        %v986 = vadd.f32 %v745, %v902
        %v987 = vadd.f32 %v746, %v905
        %v988 = vadd.f32 %v747, %v910
        %v989 = vadd.f32 %v748, %v913
        %v990 = vadd.f32 %v749, %v918
        %v991 = vadd.f32 %v750, %v921
        %v992 = vadd.f32 %v751, %v926
        %v993 = vadd.f32 %v752, %v929
        %v994 = vadd.f32 %v753, %v934
        %v995 = vadd.f32 %v754, %v937
        %v996 = vadd.f32 %v755, %v942
        %v997 = vadd.f32 %v756, %v945
        %v998 = vadd.f32 %v757, %v950
        %v999 = vadd.f32 %v758, %v953
        %v1000 = vadd.f32 %v759, %v958
        %v1001 = vadd.f32 %v760, %v961
        %v1002 = vadd.f32 %v761, %v966
        %v1003 = vadd.f32 %v762, %v969
        %vm1004 = vcmask 31744
        %1005 = vst.msk [vmem:[%s394] sm:$0xff] %vm1004, %v972
        %1006 = vst.msk [vmem:[%s394 + $0x8] sm:$0xff] %vm1004, %v973
        %1007 = vst.msk [vmem:[%s394 + $0x10] sm:$0xff] %vm1004, %v974
        %1008 = vst.msk [vmem:[%s394 + $0x18] sm:$0xff] %vm1004, %v975
        %1009 = vst.msk [vmem:[%s394 + $0x20] sm:$0xff] %vm1004, %v976
        %1010 = vst.msk [vmem:[%s394 + $0x28] sm:$0xff] %vm1004, %v977
        %1011 = vst.msk [vmem:[%s394 + $0x30] sm:$0xff] %vm1004, %v978
        %1012 = vst.msk [vmem:[%s394 + $0x38] sm:$0xff] %vm1004, %v979
        %1013 = vst.msk [vmem:[%s394 + $0x40] sm:$0xff] %vm1004, %v980
        %1014 = vst.msk [vmem:[%s394 + $0x48] sm:$0xff] %vm1004, %v981
        %1015 = vst.msk [vmem:[%s394 + $0x50] sm:$0xff] %vm1004, %v982
        %1016 = vst.msk [vmem:[%s394 + $0x58] sm:$0xff] %vm1004, %v983
        %1017 = vst.msk [vmem:[%s394 + $0x60] sm:$0xff] %vm1004, %v984
        %1018 = vst.msk [vmem:[%s394 + $0x68] sm:$0xff] %vm1004, %v985
        %1019 = vst.msk [vmem:[%s394 + $0x70] sm:$0xff] %vm1004, %v986
        %1020 = vst.msk [vmem:[%s394 + $0x78] sm:$0xff] %vm1004, %v987
        %1021 = vst.msk [vmem:[%s394 + $0x80] sm:$0xff] %vm1004, %v988
        %1022 = vst.msk [vmem:[%s394 + $0x88] sm:$0xff] %vm1004, %v989
        %1023 = vst.msk [vmem:[%s394 + $0x90] sm:$0xff] %vm1004, %v990
        %1024 = vst.msk [vmem:[%s394 + $0x98] sm:$0xff] %vm1004, %v991
        %1025 = vst.msk [vmem:[%s394 + $0xa0] sm:$0xff] %vm1004, %v992
        %1026 = vst.msk [vmem:[%s394 + $0xa8] sm:$0xff] %vm1004, %v993
        %1027 = vst.msk [vmem:[%s394 + $0xb0] sm:$0xff] %vm1004, %v994
        %1028 = vst.msk [vmem:[%s394 + $0xb8] sm:$0xff] %vm1004, %v995
        %1029 = vst.msk [vmem:[%s394 + $0xc0] sm:$0xff] %vm1004, %v996
        %1030 = vst.msk [vmem:[%s394 + $0xc8] sm:$0xff] %vm1004, %v997
        %1031 = vst.msk [vmem:[%s394 + $0xd0] sm:$0xff] %vm1004, %v998
        %1032 = vst.msk [vmem:[%s394 + $0xd8] sm:$0xff] %vm1004, %v999
        %1033 = vst.msk [vmem:[%s394 + $0xe0] sm:$0xff] %vm1004, %v1000
        %1034 = vst.msk [vmem:[%s394 + $0xe8] sm:$0xff] %vm1004, %v1001
        %1035 = vst.msk [vmem:[%s394 + $0xf0] sm:$0xff] %vm1004, %v1002
        %1036 = vst.msk [vmem:[%s394 + $0xf8] sm:$0xff] %vm1004, %v1003
        %v1037 = vld [vmem:[%s403] sm:$0xff]
        %v1038 = vld [vmem:[%s403 + $0x8] sm:$0xff]
        %v1039 = vld [vmem:[%s403 + $0x10] sm:$0xff]
        %v1040 = vld [vmem:[%s403 + $0x18] sm:$0xff]
        %v1041 = vld [vmem:[%s403 + $0x20] sm:$0xff]
        %v1042 = vld [vmem:[%s403 + $0x28] sm:$0xff]
        %v1043 = vld [vmem:[%s403 + $0x30] sm:$0xff]
        %v1044 = vld [vmem:[%s403 + $0x38] sm:$0xff]
        %v1045 = vld [vmem:[%s403 + $0x40] sm:$0xff]
        %v1046 = vld [vmem:[%s403 + $0x48] sm:$0xff]
        %v1047 = vld [vmem:[%s403 + $0x50] sm:$0xff]
        %v1048 = vld [vmem:[%s403 + $0x58] sm:$0xff]
        %v1049 = vld [vmem:[%s403 + $0x60] sm:$0xff]
        %v1050 = vld [vmem:[%s403 + $0x68] sm:$0xff]
        %v1051 = vld [vmem:[%s403 + $0x70] sm:$0xff]
        %v1052 = vld [vmem:[%s403 + $0x78] sm:$0xff]
        %v1053 = vld [vmem:[%s403 + $0x80] sm:$0xff]
        %v1054 = vld [vmem:[%s403 + $0x88] sm:$0xff]
        %v1055 = vld [vmem:[%s403 + $0x90] sm:$0xff]
        %v1056 = vld [vmem:[%s403 + $0x98] sm:$0xff]
        %v1057 = vld [vmem:[%s403 + $0xa0] sm:$0xff]
        %v1058 = vld [vmem:[%s403 + $0xa8] sm:$0xff]
        %v1059 = vld [vmem:[%s403 + $0xb0] sm:$0xff]
        %v1060 = vld [vmem:[%s403 + $0xb8] sm:$0xff]
        %v1061 = vld [vmem:[%s403 + $0xc0] sm:$0xff]
        %v1062 = vld [vmem:[%s403 + $0xc8] sm:$0xff]
        %v1063 = vld [vmem:[%s403 + $0xd0] sm:$0xff]
        %v1064 = vld [vmem:[%s403 + $0xd8] sm:$0xff]
        %v1065 = vld [vmem:[%s403 + $0xe0] sm:$0xff]
        %v1066 = vld [vmem:[%s403 + $0xe8] sm:$0xff]
        %v1067 = vld [vmem:[%s403 + $0xf0] sm:$0xff]
        %v1068 = vld [vmem:[%s403 + $0xf8] sm:$0xff]
        %v1069 = vunpack.c.l.bf16 %v699
        %v1070 = vunpack.c.h.bf16 %v699
        %v1071 = vunpack.c.l.bf16 %v700
        %v1072 = vunpack.c.h.bf16 %v700
        %v1073 = vunpack.c.l.bf16 %v701
        %v1074 = vunpack.c.h.bf16 %v701
        %v1075 = vunpack.c.l.bf16 %v702
        %v1076 = vunpack.c.h.bf16 %v702
        %v1077 = vunpack.c.l.bf16 %v703
        %v1078 = vunpack.c.h.bf16 %v703
        %v1079 = vunpack.c.l.bf16 %v704
        %v1080 = vunpack.c.h.bf16 %v704
        %v1081 = vunpack.c.l.bf16 %v705
        %v1082 = vunpack.c.h.bf16 %v705
        %v1083 = vunpack.c.l.bf16 %v706
        %v1084 = vunpack.c.h.bf16 %v706
        %v1085 = vunpack.c.l.bf16 %v707
        %v1086 = vunpack.c.h.bf16 %v707
        %v1087 = vunpack.c.l.bf16 %v708
        %v1088 = vunpack.c.h.bf16 %v708
        %v1089 = vunpack.c.l.bf16 %v709
        %v1090 = vunpack.c.h.bf16 %v709
        %v1091 = vunpack.c.l.bf16 %v710
        %v1092 = vunpack.c.h.bf16 %v710
        %v1093 = vunpack.c.l.bf16 %v711
        %v1094 = vunpack.c.h.bf16 %v711
        %v1095 = vunpack.c.l.bf16 %v712
        %v1096 = vunpack.c.h.bf16 %v712
        %v1097 = vunpack.c.l.bf16 %v713
        %v1098 = vunpack.c.h.bf16 %v713
        %v1099 = vunpack.c.l.bf16 %v714
        %v1100 = vunpack.c.h.bf16 %v714
        %1101 = vadd.xlane.f32.xlu0 %v1069
        %v1102 = vpop.xlane.xlu0 %1101
        %1103 = vadd.xlane.f32.xlu0 %v1070
        %v1104 = vpop.xlane.xlu0 %1103
        %1105 = vadd.xlane.f32.xlu0 %v1071
        %v1106 = vpop.xlane.xlu0 %1105
        %1107 = vadd.xlane.f32.xlu0 %v1072
        %v1108 = vpop.xlane.xlu0 %1107
        %1109 = vadd.xlane.f32.xlu0 %v1073
        %v1110 = vpop.xlane.xlu0 %1109
        %1111 = vadd.xlane.f32.xlu0 %v1074
        %v1112 = vpop.xlane.xlu0 %1111
        %1113 = vadd.xlane.f32.xlu0 %v1075
        %v1114 = vpop.xlane.xlu0 %1113
        %1115 = vadd.xlane.f32.xlu0 %v1076
        %v1116 = vpop.xlane.xlu0 %1115
        %1117 = vadd.xlane.f32.xlu0 %v1077
        %v1118 = vpop.xlane.xlu0 %1117
        %1119 = vadd.xlane.f32.xlu0 %v1078
        %v1120 = vpop.xlane.xlu0 %1119
        %1121 = vadd.xlane.f32.xlu0 %v1079
        %v1122 = vpop.xlane.xlu0 %1121
        %1123 = vadd.xlane.f32.xlu0 %v1080
        %v1124 = vpop.xlane.xlu0 %1123
        %1125 = vadd.xlane.f32.xlu0 %v1081
        %v1126 = vpop.xlane.xlu0 %1125
        %1127 = vadd.xlane.f32.xlu0 %v1082
        %v1128 = vpop.xlane.xlu0 %1127
        %1129 = vadd.xlane.f32.xlu0 %v1083
        %v1130 = vpop.xlane.xlu0 %1129
        %1131 = vadd.xlane.f32.xlu0 %v1084
        %v1132 = vpop.xlane.xlu0 %1131
        %1133 = vadd.xlane.f32.xlu0 %v1085
        %v1134 = vpop.xlane.xlu0 %1133
        %1135 = vadd.xlane.f32.xlu0 %v1086
        %v1136 = vpop.xlane.xlu0 %1135
        %1137 = vadd.xlane.f32.xlu0 %v1087
        %v1138 = vpop.xlane.xlu0 %1137
        %1139 = vadd.xlane.f32.xlu0 %v1088
        %v1140 = vpop.xlane.xlu0 %1139
        %1141 = vadd.xlane.f32.xlu0 %v1089
        %v1142 = vpop.xlane.xlu0 %1141
        %1143 = vadd.xlane.f32.xlu0 %v1090
        %v1144 = vpop.xlane.xlu0 %1143
        %1145 = vadd.xlane.f32.xlu0 %v1091
        %v1146 = vpop.xlane.xlu0 %1145
        %1147 = vadd.xlane.f32.xlu0 %v1092
        %v1148 = vpop.xlane.xlu0 %1147
        %1149 = vadd.xlane.f32.xlu0 %v1093
        %v1150 = vpop.xlane.xlu0 %1149
        %1151 = vadd.xlane.f32.xlu0 %v1094
        %v1152 = vpop.xlane.xlu0 %1151
        %1153 = vadd.xlane.f32.xlu0 %v1095
        %v1154 = vpop.xlane.xlu0 %1153
        %1155 = vadd.xlane.f32.xlu0 %v1096
        %v1156 = vpop.xlane.xlu0 %1155
        %1157 = vadd.xlane.f32.xlu0 %v1097
        %v1158 = vpop.xlane.xlu0 %1157
        %1159 = vadd.xlane.f32.xlu0 %v1098
        %v1160 = vpop.xlane.xlu0 %1159
        %1161 = vadd.xlane.f32.xlu0 %v1099
        %v1162 = vpop.xlane.xlu0 %1161
        %1163 = vadd.xlane.f32.xlu0 %v1100
        %v1164 = vpop.xlane.xlu0 %1163
        %v1165 = vadd.f32 %v1037, %v1102
        %v1166 = vadd.f32 %v1038, %v1104
        %v1167 = vadd.f32 %v1039, %v1106
        %v1168 = vadd.f32 %v1040, %v1108
        %v1169 = vadd.f32 %v1041, %v1110
        %v1170 = vadd.f32 %v1042, %v1112
        %v1171 = vadd.f32 %v1043, %v1114
        %v1172 = vadd.f32 %v1044, %v1116
        %v1173 = vadd.f32 %v1045, %v1118
        %v1174 = vadd.f32 %v1046, %v1120
        %v1175 = vadd.f32 %v1047, %v1122
        %v1176 = vadd.f32 %v1048, %v1124
        %v1177 = vadd.f32 %v1049, %v1126
        %v1178 = vadd.f32 %v1050, %v1128
        %v1179 = vadd.f32 %v1051, %v1130
        %v1180 = vadd.f32 %v1052, %v1132
        %v1181 = vadd.f32 %v1053, %v1134
        %v1182 = vadd.f32 %v1054, %v1136
        %v1183 = vadd.f32 %v1055, %v1138
        %v1184 = vadd.f32 %v1056, %v1140
        %v1185 = vadd.f32 %v1057, %v1142
        %v1186 = vadd.f32 %v1058, %v1144
        %v1187 = vadd.f32 %v1059, %v1146
        %v1188 = vadd.f32 %v1060, %v1148
        %v1189 = vadd.f32 %v1061, %v1150
        %v1190 = vadd.f32 %v1062, %v1152
        %v1191 = vadd.f32 %v1063, %v1154
        %v1192 = vadd.f32 %v1064, %v1156
        %v1193 = vadd.f32 %v1065, %v1158
        %v1194 = vadd.f32 %v1066, %v1160
        %v1195 = vadd.f32 %v1067, %v1162
        %v1196 = vadd.f32 %v1068, %v1164
        %vm1197 = vcmask 7168
        %1198 = vst.msk [vmem:[%s403] sm:$0xff] %vm1197, %v1165
        %1199 = vst.msk [vmem:[%s403 + $0x8] sm:$0xff] %vm1197, %v1166
        %1200 = vst.msk [vmem:[%s403 + $0x10] sm:$0xff] %vm1197, %v1167
        %1201 = vst.msk [vmem:[%s403 + $0x18] sm:$0xff] %vm1197, %v1168
        %1202 = vst.msk [vmem:[%s403 + $0x20] sm:$0xff] %vm1197, %v1169
        %1203 = vst.msk [vmem:[%s403 + $0x28] sm:$0xff] %vm1197, %v1170
        %1204 = vst.msk [vmem:[%s403 + $0x30] sm:$0xff] %vm1197, %v1171
        %1205 = vst.msk [vmem:[%s403 + $0x38] sm:$0xff] %vm1197, %v1172
        %1206 = vst.msk [vmem:[%s403 + $0x40] sm:$0xff] %vm1197, %v1173
        %1207 = vst.msk [vmem:[%s403 + $0x48] sm:$0xff] %vm1197, %v1174
        %1208 = vst.msk [vmem:[%s403 + $0x50] sm:$0xff] %vm1197, %v1175
        %1209 = vst.msk [vmem:[%s403 + $0x58] sm:$0xff] %vm1197, %v1176
        %1210 = vst.msk [vmem:[%s403 + $0x60] sm:$0xff] %vm1197, %v1177
        %1211 = vst.msk [vmem:[%s403 + $0x68] sm:$0xff] %vm1197, %v1178
        %1212 = vst.msk [vmem:[%s403 + $0x70] sm:$0xff] %vm1197, %v1179
        %1213 = vst.msk [vmem:[%s403 + $0x78] sm:$0xff] %vm1197, %v1180
        %1214 = vst.msk [vmem:[%s403 + $0x80] sm:$0xff] %vm1197, %v1181
        %1215 = vst.msk [vmem:[%s403 + $0x88] sm:$0xff] %vm1197, %v1182
        %1216 = vst.msk [vmem:[%s403 + $0x90] sm:$0xff] %vm1197, %v1183
        %1217 = vst.msk [vmem:[%s403 + $0x98] sm:$0xff] %vm1197, %v1184
        %1218 = vst.msk [vmem:[%s403 + $0xa0] sm:$0xff] %vm1197, %v1185
        %1219 = vst.msk [vmem:[%s403 + $0xa8] sm:$0xff] %vm1197, %v1186
        %1220 = vst.msk [vmem:[%s403 + $0xb0] sm:$0xff] %vm1197, %v1187
        %1221 = vst.msk [vmem:[%s403 + $0xb8] sm:$0xff] %vm1197, %v1188
        %1222 = vst.msk [vmem:[%s403 + $0xc0] sm:$0xff] %vm1197, %v1189
        %1223 = vst.msk [vmem:[%s403 + $0xc8] sm:$0xff] %vm1197, %v1190
        %1224 = vst.msk [vmem:[%s403 + $0xd0] sm:$0xff] %vm1197, %v1191
        %1225 = vst.msk [vmem:[%s403 + $0xd8] sm:$0xff] %vm1197, %v1192
        %1226 = vst.msk [vmem:[%s403 + $0xe0] sm:$0xff] %vm1197, %v1193
        %1227 = vst.msk [vmem:[%s403 + $0xe8] sm:$0xff] %vm1197, %v1194
        %1228 = vst.msk [vmem:[%s403 + $0xf0] sm:$0xff] %vm1197, %v1195
        %1229 = vst.msk [vmem:[%s403 + $0xf8] sm:$0xff] %vm1197, %v1196
        %s1230 = scalar_lea.vmem %s368, 1
        %v1231 = vld [vmem:[%s1230] sm:$0x1]
        %s1232 = scalar_lea.vmem %s355, 4
        %v1233 = vld [vmem:[%s1232] sm:$0x1]
        %v1234 = vld [vmem:[%s1232 + $0x1] sm:$0x1]
        %v1235 = vld [vmem:[%s1232 + $0x2] sm:$0x1]
        %v1236 = vmul.f32 %v1233, %v1231
        %v1237 = vmul.f32 %v1234, %v1231
        %v1238 = vmul.f32 %v1235, %v1231
        %v1239 = vmul.f32 %v506, %v1236
        %v1240 = vmul.f32 %v508, %v1237
        %v1241 = vadd.f32 %v1239, %v1240
        %v1242 = vmul.f32 %v511, %v1238
        %v1243 = vadd.f32 %v1241, %v1242
        %v1244 = vadd.f32 %v1243, %v514
        %v1245 = vmul.f32 %v516, %v1236
        %v1246 = vmul.f32 %v518, %v1237
        %v1247 = vadd.f32 %v1245, %v1246
        %v1248 = vmul.f32 %v521, %v1238
        %v1249 = vadd.f32 %v1247, %v1248
        %v1250 = vadd.f32 %v1249, %v524
        %v1251 = vmul.f32 %v526, %v1236
        %v1252 = vmul.f32 %v528, %v1237
        %v1253 = vadd.f32 %v1251, %v1252
        %v1254 = vmul.f32 %v531, %v1238
        %v1255 = vadd.f32 %v1253, %v1254
        %v1256 = vadd.f32 %v1255, %v534
        %v1257 = vsub.f32 %v1244, -2.0
        %v1258 = vmul.f32 %v1257, 2.0
        %v1259 = vfloor.f32 %v1258
        %v1260 = vcvt.f32.s32.to.zero.pseudo %v1259
        %v1261 = vsub.f32 %v1250, -2.0
        %v1262 = vmul.f32 %v1261, 2.0
        %v1263 = vfloor.f32 %v1262
        %v1264 = vcvt.f32.s32.to.zero.pseudo %v1263
        %v1265 = vsub.f32 %v1256, -0.5
        %v1266 = vmul.f32 %v1265, 2.0
        %v1267 = vfloor.f32 %v1266
        %v1268 = vcvt.f32.s32.to.zero.pseudo %v1267
        %vm1269 = vcmp.gt.f32.partialorder %v1231, 0.0
        %vm1270 = vcmp.ge.s32.totalorder %v1260, 0
        %vm1271 = vmand %vm1269, %vm1270
        %vm1272 = vcmp.lt.s32.totalorder %v1260, 8
        %vm1273 = vmand %vm1271, %vm1272
        %vm1274 = vcmp.ge.s32.totalorder %v1264, 0
        %vm1275 = vmand %vm1273, %vm1274
        %vm1276 = vcmp.lt.s32.totalorder %v1264, 8
        %vm1277 = vmand %vm1275, %vm1276
        %vm1278 = vcmp.ge.s32.totalorder %v1268, 0
        %vm1279 = vmand %vm1277, %vm1278
        %vm1280 = vcmp.lt.s32.totalorder %v1268, 4
        %vm1281 = vmand %vm1279, %vm1280
        %v1282 = vmul.u32 %v1260, 32
        %v1283 = vmul.u32 %v1264, 4
        %v1284 = vadd.s32 %v1282, %v1283
        %v1285 = vadd.s32 %v1284, %v1268
        %v1286 = vsel %vm1281, %v1285, 4294967295
        %v1287 = vlaneseq
        %v1288 = vshrl.u32 %v1287, 7
        %v1289 = vsub.s32 0, %v1288
        %v1290 = vrot.slane %v1286, %v1289
        %vm1291 = vcmp.eq.s32.totalorder %v567, %v1290
        %vm1292 = vcmp.eq.s32.totalorder %v568, %v1290
        %vm1293 = vcmp.eq.s32.totalorder %v569, %v1290
        %vm1294 = vcmp.eq.s32.totalorder %v570, %v1290
        %vm1295 = vcmp.eq.s32.totalorder %v571, %v1290
        %vm1296 = vcmp.eq.s32.totalorder %v572, %v1290
        %vm1297 = vcmp.eq.s32.totalorder %v573, %v1290
        %vm1298 = vcmp.eq.s32.totalorder %v574, %v1290
        %vm1299 = vcmp.eq.s32.totalorder %v575, %v1290
        %vm1300 = vcmp.eq.s32.totalorder %v576, %v1290
        %vm1301 = vcmp.eq.s32.totalorder %v577, %v1290
        %vm1302 = vcmp.eq.s32.totalorder %v578, %v1290
        %vm1303 = vcmp.eq.s32.totalorder %v579, %v1290
        %vm1304 = vcmp.eq.s32.totalorder %v580, %v1290
        %vm1305 = vcmp.eq.s32.totalorder %v581, %v1290
        %vm1306 = vcmp.eq.s32.totalorder %v582, %v1290
        %vm1307 = vcmp.eq.s32.totalorder %v583, %v1290
        %vm1308 = vcmp.eq.s32.totalorder %v584, %v1290
        %vm1309 = vcmp.eq.s32.totalorder %v585, %v1290
        %vm1310 = vcmp.eq.s32.totalorder %v586, %v1290
        %vm1311 = vcmp.eq.s32.totalorder %v587, %v1290
        %vm1312 = vcmp.eq.s32.totalorder %v588, %v1290
        %vm1313 = vcmp.eq.s32.totalorder %v589, %v1290
        %vm1314 = vcmp.eq.s32.totalorder %v590, %v1290
        %vm1315 = vcmp.eq.s32.totalorder %v591, %v1290
        %vm1316 = vcmp.eq.s32.totalorder %v592, %v1290
        %vm1317 = vcmp.eq.s32.totalorder %v593, %v1290
        %vm1318 = vcmp.eq.s32.totalorder %v594, %v1290
        %vm1319 = vcmp.eq.s32.totalorder %v595, %v1290
        %vm1320 = vcmp.eq.s32.totalorder %v596, %v1290
        %vm1321 = vcmp.eq.s32.totalorder %v597, %v1290
        %vm1322 = vcmp.eq.s32.totalorder %v598, %v1290
        %v1323 = vsel %vm1291, 1, 0
        %v1324 = vsel %vm1292, 1, 0
        %v1325 = vsel %vm1293, 1, 0
        %v1326 = vsel %vm1294, 1, 0
        %v1327 = vsel %vm1295, 1, 0
        %v1328 = vsel %vm1296, 1, 0
        %v1329 = vsel %vm1297, 1, 0
        %v1330 = vsel %vm1298, 1, 0
        %v1331 = vsel %vm1299, 1, 0
        %v1332 = vsel %vm1300, 1, 0
        %v1333 = vsel %vm1301, 1, 0
        %v1334 = vsel %vm1302, 1, 0
        %v1335 = vsel %vm1303, 1, 0
        %v1336 = vsel %vm1304, 1, 0
        %v1337 = vsel %vm1305, 1, 0
        %v1338 = vsel %vm1306, 1, 0
        %v1339 = vsel %vm1307, 1, 0
        %v1340 = vsel %vm1308, 1, 0
        %v1341 = vsel %vm1309, 1, 0
        %v1342 = vsel %vm1310, 1, 0
        %v1343 = vsel %vm1311, 1, 0
        %v1344 = vsel %vm1312, 1, 0
        %v1345 = vsel %vm1313, 1, 0
        %v1346 = vsel %vm1314, 1, 0
        %v1347 = vsel %vm1315, 1, 0
        %v1348 = vsel %vm1316, 1, 0
        %v1349 = vsel %vm1317, 1, 0
        %v1350 = vsel %vm1318, 1, 0
        %v1351 = vsel %vm1319, 1, 0
        %v1352 = vsel %vm1320, 1, 0
        %v1353 = vsel %vm1321, 1, 0
        %v1354 = vsel %vm1322, 1, 0
        %v1355 = vcvt.s32.f32 %v1323
        %v1356 = vcvt.s32.f32 %v1324
        %v1357 = vcvt.s32.f32 %v1325
        %v1358 = vcvt.s32.f32 %v1326
        %v1359 = vcvt.s32.f32 %v1327
        %v1360 = vcvt.s32.f32 %v1328
        %v1361 = vcvt.s32.f32 %v1329
        %v1362 = vcvt.s32.f32 %v1330
        %v1363 = vcvt.s32.f32 %v1331
        %v1364 = vcvt.s32.f32 %v1332
        %v1365 = vcvt.s32.f32 %v1333
        %v1366 = vcvt.s32.f32 %v1334
        %v1367 = vcvt.s32.f32 %v1335
        %v1368 = vcvt.s32.f32 %v1336
        %v1369 = vcvt.s32.f32 %v1337
        %v1370 = vcvt.s32.f32 %v1338
        %v1371 = vcvt.s32.f32 %v1339
        %v1372 = vcvt.s32.f32 %v1340
        %v1373 = vcvt.s32.f32 %v1341
        %v1374 = vcvt.s32.f32 %v1342
        %v1375 = vcvt.s32.f32 %v1343
        %v1376 = vcvt.s32.f32 %v1344
        %v1377 = vcvt.s32.f32 %v1345
        %v1378 = vcvt.s32.f32 %v1346
        %v1379 = vcvt.s32.f32 %v1347
        %v1380 = vcvt.s32.f32 %v1348
        %v1381 = vcvt.s32.f32 %v1349
        %v1382 = vcvt.s32.f32 %v1350
        %v1383 = vcvt.s32.f32 %v1351
        %v1384 = vcvt.s32.f32 %v1352
        %v1385 = vcvt.s32.f32 %v1353
        %v1386 = vcvt.s32.f32 %v1354
        %v1387 = vpack.c.bf16 %v1356, %v1355
        %v1388 = vpack.c.bf16 %v1358, %v1357
        %v1389 = vpack.c.bf16 %v1360, %v1359
        %v1390 = vpack.c.bf16 %v1362, %v1361
        %v1391 = vpack.c.bf16 %v1364, %v1363
        %v1392 = vpack.c.bf16 %v1366, %v1365
        %v1393 = vpack.c.bf16 %v1368, %v1367
        %v1394 = vpack.c.bf16 %v1370, %v1369
        %v1395 = vpack.c.bf16 %v1372, %v1371
        %v1396 = vpack.c.bf16 %v1374, %v1373
        %v1397 = vpack.c.bf16 %v1376, %v1375
        %v1398 = vpack.c.bf16 %v1378, %v1377
        %v1399 = vpack.c.bf16 %v1380, %v1379
        %v1400 = vpack.c.bf16 %v1382, %v1381
        %v1401 = vpack.c.bf16 %v1384, %v1383
        %v1402 = vpack.c.bf16 %v1386, %v1385
        %s1403 = scalar_lea.vmem %s382, 64
        %v1404 = vld [vmem:[%s1403] sm:$0xf]
        %v1405 = vld [vmem:[%s1403 + $0x4] sm:$0xf]
        %v1406 = vld [vmem:[%s1403 + $0x8] sm:$0xf]
        %v1407 = vld [vmem:[%s1403 + $0xc] sm:$0xf]
        %v1408 = vld [vmem:[%s1403 + $0x10] sm:$0xf]
        %v1409 = vld [vmem:[%s1403 + $0x14] sm:$0xf]
        %v1410 = vld [vmem:[%s1403 + $0x18] sm:$0xf]
        %v1411 = vld [vmem:[%s1403 + $0x1c] sm:$0xf]
        %v1412 = vld [vmem:[%s1403 + $0x20] sm:$0xf]
        %v1413 = vld [vmem:[%s1403 + $0x24] sm:$0xf]
        %v1414 = vld [vmem:[%s1403 + $0x28] sm:$0xf]
        %v1415 = vld [vmem:[%s1403 + $0x2c] sm:$0xf]
        %v1416 = vld [vmem:[%s1403 + $0x30] sm:$0xf]
        %v1417 = vld [vmem:[%s1403 + $0x34] sm:$0xf]
        %v1418 = vld [vmem:[%s1403 + $0x38] sm:$0xf]
        %v1419 = vld [vmem:[%s1403 + $0x3c] sm:$0xf]
        %v1420 = vld [vmem:[%s394] sm:$0xff]
        %v1421 = vld [vmem:[%s394 + $0x8] sm:$0xff]
        %v1422 = vld [vmem:[%s394 + $0x10] sm:$0xff]
        %v1423 = vld [vmem:[%s394 + $0x18] sm:$0xff]
        %v1424 = vld [vmem:[%s394 + $0x20] sm:$0xff]
        %v1425 = vld [vmem:[%s394 + $0x28] sm:$0xff]
        %v1426 = vld [vmem:[%s394 + $0x30] sm:$0xff]
        %v1427 = vld [vmem:[%s394 + $0x38] sm:$0xff]
        %v1428 = vld [vmem:[%s394 + $0x40] sm:$0xff]
        %v1429 = vld [vmem:[%s394 + $0x48] sm:$0xff]
        %v1430 = vld [vmem:[%s394 + $0x50] sm:$0xff]
        %v1431 = vld [vmem:[%s394 + $0x58] sm:$0xff]
        %v1432 = vld [vmem:[%s394 + $0x60] sm:$0xff]
        %v1433 = vld [vmem:[%s394 + $0x68] sm:$0xff]
        %v1434 = vld [vmem:[%s394 + $0x70] sm:$0xff]
        %v1435 = vld [vmem:[%s394 + $0x78] sm:$0xff]
        %v1436 = vld [vmem:[%s394 + $0x80] sm:$0xff]
        %v1437 = vld [vmem:[%s394 + $0x88] sm:$0xff]
        %v1438 = vld [vmem:[%s394 + $0x90] sm:$0xff]
        %v1439 = vld [vmem:[%s394 + $0x98] sm:$0xff]
        %v1440 = vld [vmem:[%s394 + $0xa0] sm:$0xff]
        %v1441 = vld [vmem:[%s394 + $0xa8] sm:$0xff]
        %v1442 = vld [vmem:[%s394 + $0xb0] sm:$0xff]
        %v1443 = vld [vmem:[%s394 + $0xb8] sm:$0xff]
        %v1444 = vld [vmem:[%s394 + $0xc0] sm:$0xff]
        %v1445 = vld [vmem:[%s394 + $0xc8] sm:$0xff]
        %v1446 = vld [vmem:[%s394 + $0xd0] sm:$0xff]
        %v1447 = vld [vmem:[%s394 + $0xd8] sm:$0xff]
        %v1448 = vld [vmem:[%s394 + $0xe0] sm:$0xff]
        %v1449 = vld [vmem:[%s394 + $0xe8] sm:$0xff]
        %v1450 = vld [vmem:[%s394 + $0xf0] sm:$0xff]
        %v1451 = vld [vmem:[%s394 + $0xf8] sm:$0xff]
        %v1468 = vunpack.c.l.b16 %v1404
        %v1469 = vunpack.c.l.b16 %v1405
        %v1470 = vunpack.c.l.b16 %v1406
        %v1471 = vunpack.c.l.b16 %v1407
        %v1472 = vunpack.c.l.b16 %v1408
        %v1473 = vunpack.c.l.b16 %v1409
        %v1474 = vunpack.c.l.b16 %v1410
        %v1475 = vunpack.c.l.b16 %v1411
        %v1476 = vunpack.c.l.b16 %v1412
        %v1477 = vunpack.c.l.b16 %v1413
        %v1478 = vunpack.c.l.b16 %v1414
        %v1479 = vunpack.c.l.b16 %v1415
        %v1480 = vunpack.c.l.b16 %v1416
        %v1481 = vunpack.c.l.b16 %v1417
        %v1482 = vunpack.c.l.b16 %v1418
        %v1483 = vunpack.c.l.b16 %v1419
        %v1484 = vpack.c.b16 %v1469, %v1468
        %v1485 = vpack.c.b16 %v1471, %v1470
        %v1486 = vpack.c.b16 %v1473, %v1472
        %v1487 = vpack.c.b16 %v1475, %v1474
        %v1488 = vpack.c.b16 %v1477, %v1476
        %v1489 = vpack.c.b16 %v1479, %v1478
        %v1490 = vpack.c.b16 %v1481, %v1480
        %v1491 = vpack.c.b16 %v1483, %v1482
        %1500 = vmatprep.subr.bf16.mxu0 0
        %1501 = vmatpush1.bf16.msra.mxu0 %v1484
        %1502 = vmatprep.subr.bf16.mxu0 0
        %1503 = vmatpush1.bf16.msra.mxu0 %v1485
        %1504 = vmatprep.subr.bf16.mxu0 0
        %1505 = vmatpush1.bf16.msra.mxu0 %v1486
        %1506 = vmatprep.subr.bf16.mxu0 0
        %1507 = vmatpush1.bf16.msra.mxu0 %v1487
        %1508 = vmatprep.subr.bf16.mxu0 0
        %1509 = vmatpush1.bf16.msra.mxu0 %v1488
        %1510 = vmatprep.subr.bf16.mxu0 0
        %1511 = vmatpush1.bf16.msra.mxu0 %v1489
        %1512 = vmatprep.subr.bf16.mxu0 0
        %1513 = vmatpush1.bf16.msra.mxu0 %v1490
        %1514 = vmatprep.subr.bf16.mxu0 0
        %1515 = vmatpush1.bf16.msra.mxu0 %v1491
        %1516 = vmatprep.subr.bf16.mxu0 0
        %1517 = vmatpush1.bf16.msra.mxu0 0
        %1518 = vmatprep.subr.bf16.mxu0 0
        %1519 = vmatpush1.bf16.msra.mxu0 0
        %1520 = vmatprep.subr.bf16.mxu0 0
        %1521 = vmatpush1.bf16.msra.mxu0 0
        %1522 = vmatprep.subr.bf16.mxu0 0
        %1523 = vmatpush1.bf16.msra.mxu0 0
        %1524 = vmatprep.subr.bf16.mxu0 0
        %1525 = vmatpush1.bf16.msra.mxu0 0
        %1526 = vmatprep.subr.bf16.mxu0 0
        %1527 = vmatpush1.bf16.msra.mxu0 0
        %1528 = vmatprep.subr.bf16.mxu0 0
        %1529 = vmatpush1.bf16.msra.mxu0 0
        %1530 = vmatprep.subr.bf16.mxu0 0
        %1531 = vmatpush1.bf16.msra.mxu0 0
        %1532 = vmatprep.mubr.bf16.mxu0 0
        %1533 = vmatmul.mubr.bf16.gmra.mrb[0].mxu0 %v1387
        %v1534 = vpop.f32.mrb[0].mxu0
        %v1535 = vadd.f32 0.0, %v1534
        %v1536 = vpop.f32.mrb[0].mxu0
        %v1537 = vpop.f32.mrb[0].mxu0
        %v1538 = vadd.f32 0.0, %v1537
        %v1539 = vpop.f32.mrb[0].mxu0
        %1540 = vmatprep.mubr.bf16.mxu0 0
        %1541 = vmatmul.mubr.bf16.gmra.mrb[0].mxu0 %v1388
        %v1542 = vpop.f32.mrb[0].mxu0
        %v1543 = vadd.f32 0.0, %v1542
        %v1544 = vpop.f32.mrb[0].mxu0
        %v1545 = vpop.f32.mrb[0].mxu0
        %v1546 = vadd.f32 0.0, %v1545
        %v1547 = vpop.f32.mrb[0].mxu0
        %1548 = vmatprep.mubr.bf16.mxu0 0
        %1549 = vmatmul.mubr.bf16.gmra.mrb[0].mxu0 %v1389
        %v1550 = vpop.f32.mrb[0].mxu0
        %v1551 = vadd.f32 0.0, %v1550
        %v1552 = vpop.f32.mrb[0].mxu0
        %v1553 = vpop.f32.mrb[0].mxu0
        %v1554 = vadd.f32 0.0, %v1553
        %v1555 = vpop.f32.mrb[0].mxu0
        %1556 = vmatprep.mubr.bf16.mxu0 0
        %1557 = vmatmul.mubr.bf16.gmra.mrb[0].mxu0 %v1390
        %v1558 = vpop.f32.mrb[0].mxu0
        %v1559 = vadd.f32 0.0, %v1558
        %v1560 = vpop.f32.mrb[0].mxu0
        %v1561 = vpop.f32.mrb[0].mxu0
        %v1562 = vadd.f32 0.0, %v1561
        %v1563 = vpop.f32.mrb[0].mxu0
        %1564 = vmatprep.mubr.bf16.mxu0 0
        %1565 = vmatmul.mubr.bf16.gmra.mrb[0].mxu0 %v1391
        %v1566 = vpop.f32.mrb[0].mxu0
        %v1567 = vadd.f32 0.0, %v1566
        %v1568 = vpop.f32.mrb[0].mxu0
        %v1569 = vpop.f32.mrb[0].mxu0
        %v1570 = vadd.f32 0.0, %v1569
        %v1571 = vpop.f32.mrb[0].mxu0
        %1572 = vmatprep.mubr.bf16.mxu0 0
        %1573 = vmatmul.mubr.bf16.gmra.mrb[0].mxu0 %v1392
        %v1574 = vpop.f32.mrb[0].mxu0
        %v1575 = vadd.f32 0.0, %v1574
        %v1576 = vpop.f32.mrb[0].mxu0
        %v1577 = vpop.f32.mrb[0].mxu0
        %v1578 = vadd.f32 0.0, %v1577
        %v1579 = vpop.f32.mrb[0].mxu0
        %1580 = vmatprep.mubr.bf16.mxu0 0
        %1581 = vmatmul.mubr.bf16.gmra.mrb[0].mxu0 %v1393
        %v1582 = vpop.f32.mrb[0].mxu0
        %v1583 = vadd.f32 0.0, %v1582
        %v1584 = vpop.f32.mrb[0].mxu0
        %v1585 = vpop.f32.mrb[0].mxu0
        %v1586 = vadd.f32 0.0, %v1585
        %v1587 = vpop.f32.mrb[0].mxu0
        %1588 = vmatprep.mubr.bf16.mxu0 0
        %1589 = vmatmul.mubr.bf16.gmra.mrb[0].mxu0 %v1394
        %v1590 = vpop.f32.mrb[0].mxu0
        %v1591 = vadd.f32 0.0, %v1590
        %v1592 = vpop.f32.mrb[0].mxu0
        %v1593 = vpop.f32.mrb[0].mxu0
        %v1594 = vadd.f32 0.0, %v1593
        %v1595 = vpop.f32.mrb[0].mxu0
        %1596 = vmatprep.mubr.bf16.mxu0 0
        %1597 = vmatmul.mubr.bf16.gmra.mrb[0].mxu0 %v1395
        %v1598 = vpop.f32.mrb[0].mxu0
        %v1599 = vadd.f32 0.0, %v1598
        %v1600 = vpop.f32.mrb[0].mxu0
        %v1601 = vpop.f32.mrb[0].mxu0
        %v1602 = vadd.f32 0.0, %v1601
        %v1603 = vpop.f32.mrb[0].mxu0
        %1604 = vmatprep.mubr.bf16.mxu0 0
        %1605 = vmatmul.mubr.bf16.gmra.mrb[0].mxu0 %v1396
        %v1606 = vpop.f32.mrb[0].mxu0
        %v1607 = vadd.f32 0.0, %v1606
        %v1608 = vpop.f32.mrb[0].mxu0
        %v1609 = vpop.f32.mrb[0].mxu0
        %v1610 = vadd.f32 0.0, %v1609
        %v1611 = vpop.f32.mrb[0].mxu0
        %1612 = vmatprep.mubr.bf16.mxu0 0
        %1613 = vmatmul.mubr.bf16.gmra.mrb[0].mxu0 %v1397
        %v1614 = vpop.f32.mrb[0].mxu0
        %v1615 = vadd.f32 0.0, %v1614
        %v1616 = vpop.f32.mrb[0].mxu0
        %v1617 = vpop.f32.mrb[0].mxu0
        %v1618 = vadd.f32 0.0, %v1617
        %v1619 = vpop.f32.mrb[0].mxu0
        %1620 = vmatprep.mubr.bf16.mxu0 0
        %1621 = vmatmul.mubr.bf16.gmra.mrb[0].mxu0 %v1398
        %v1622 = vpop.f32.mrb[0].mxu0
        %v1623 = vadd.f32 0.0, %v1622
        %v1624 = vpop.f32.mrb[0].mxu0
        %v1625 = vpop.f32.mrb[0].mxu0
        %v1626 = vadd.f32 0.0, %v1625
        %v1627 = vpop.f32.mrb[0].mxu0
        %1628 = vmatprep.mubr.bf16.mxu0 0
        %1629 = vmatmul.mubr.bf16.gmra.mrb[0].mxu0 %v1399
        %v1630 = vpop.f32.mrb[0].mxu0
        %v1631 = vadd.f32 0.0, %v1630
        %v1632 = vpop.f32.mrb[0].mxu0
        %v1633 = vpop.f32.mrb[0].mxu0
        %v1634 = vadd.f32 0.0, %v1633
        %v1635 = vpop.f32.mrb[0].mxu0
        %1636 = vmatprep.mubr.bf16.mxu0 0
        %1637 = vmatmul.mubr.bf16.gmra.mrb[0].mxu0 %v1400
        %v1638 = vpop.f32.mrb[0].mxu0
        %v1639 = vadd.f32 0.0, %v1638
        %v1640 = vpop.f32.mrb[0].mxu0
        %v1641 = vpop.f32.mrb[0].mxu0
        %v1642 = vadd.f32 0.0, %v1641
        %v1643 = vpop.f32.mrb[0].mxu0
        %1644 = vmatprep.mubr.bf16.mxu0 0
        %1645 = vmatmul.mubr.bf16.gmra.mrb[0].mxu0 %v1401
        %v1646 = vpop.f32.mrb[0].mxu0
        %v1647 = vadd.f32 0.0, %v1646
        %v1648 = vpop.f32.mrb[0].mxu0
        %v1649 = vpop.f32.mrb[0].mxu0
        %v1650 = vadd.f32 0.0, %v1649
        %v1651 = vpop.f32.mrb[0].mxu0
        %1652 = vmatprep.mubr.bf16.mxu0 0
        %1653 = vmatmul.mubr.bf16.gmra.mrb[0].mxu0 %v1402
        %v1654 = vpop.f32.mrb[0].mxu0
        %v1655 = vadd.f32 0.0, %v1654
        %v1656 = vpop.f32.mrb[0].mxu0
        %v1657 = vpop.f32.mrb[0].mxu0
        %v1658 = vadd.f32 0.0, %v1657
        %v1659 = vpop.f32.mrb[0].mxu0
        %1660 = vdwg.mxu0
        %v1661 = vadd.f32 %v1420, %v1535
        %v1662 = vadd.f32 %v1421, %v1538
        %v1663 = vadd.f32 %v1422, %v1543
        %v1664 = vadd.f32 %v1423, %v1546
        %v1665 = vadd.f32 %v1424, %v1551
        %v1666 = vadd.f32 %v1425, %v1554
        %v1667 = vadd.f32 %v1426, %v1559
        %v1668 = vadd.f32 %v1427, %v1562
        %v1669 = vadd.f32 %v1428, %v1567
        %v1670 = vadd.f32 %v1429, %v1570
        %v1671 = vadd.f32 %v1430, %v1575
        %v1672 = vadd.f32 %v1431, %v1578
        %v1673 = vadd.f32 %v1432, %v1583
        %v1674 = vadd.f32 %v1433, %v1586
        %v1675 = vadd.f32 %v1434, %v1591
        %v1676 = vadd.f32 %v1435, %v1594
        %v1677 = vadd.f32 %v1436, %v1599
        %v1678 = vadd.f32 %v1437, %v1602
        %v1679 = vadd.f32 %v1438, %v1607
        %v1680 = vadd.f32 %v1439, %v1610
        %v1681 = vadd.f32 %v1440, %v1615
        %v1682 = vadd.f32 %v1441, %v1618
        %v1683 = vadd.f32 %v1442, %v1623
        %v1684 = vadd.f32 %v1443, %v1626
        %v1685 = vadd.f32 %v1444, %v1631
        %v1686 = vadd.f32 %v1445, %v1634
        %v1687 = vadd.f32 %v1446, %v1639
        %v1688 = vadd.f32 %v1447, %v1642
        %v1689 = vadd.f32 %v1448, %v1647
        %v1690 = vadd.f32 %v1449, %v1650
        %v1691 = vadd.f32 %v1450, %v1655
        %v1692 = vadd.f32 %v1451, %v1658
        %1693 = vst.msk [vmem:[%s394] sm:$0xff] %vm1004, %v1661
        %1694 = vst.msk [vmem:[%s394 + $0x8] sm:$0xff] %vm1004, %v1662
        %1695 = vst.msk [vmem:[%s394 + $0x10] sm:$0xff] %vm1004, %v1663
        %1696 = vst.msk [vmem:[%s394 + $0x18] sm:$0xff] %vm1004, %v1664
        %1697 = vst.msk [vmem:[%s394 + $0x20] sm:$0xff] %vm1004, %v1665
        %1698 = vst.msk [vmem:[%s394 + $0x28] sm:$0xff] %vm1004, %v1666
        %1699 = vst.msk [vmem:[%s394 + $0x30] sm:$0xff] %vm1004, %v1667
        %1700 = vst.msk [vmem:[%s394 + $0x38] sm:$0xff] %vm1004, %v1668
        %1701 = vst.msk [vmem:[%s394 + $0x40] sm:$0xff] %vm1004, %v1669
        %1702 = vst.msk [vmem:[%s394 + $0x48] sm:$0xff] %vm1004, %v1670
        %1703 = vst.msk [vmem:[%s394 + $0x50] sm:$0xff] %vm1004, %v1671
        %1704 = vst.msk [vmem:[%s394 + $0x58] sm:$0xff] %vm1004, %v1672
        %1705 = vst.msk [vmem:[%s394 + $0x60] sm:$0xff] %vm1004, %v1673
        %1706 = vst.msk [vmem:[%s394 + $0x68] sm:$0xff] %vm1004, %v1674
        %1707 = vst.msk [vmem:[%s394 + $0x70] sm:$0xff] %vm1004, %v1675
        %1708 = vst.msk [vmem:[%s394 + $0x78] sm:$0xff] %vm1004, %v1676
        %1709 = vst.msk [vmem:[%s394 + $0x80] sm:$0xff] %vm1004, %v1677
        %1710 = vst.msk [vmem:[%s394 + $0x88] sm:$0xff] %vm1004, %v1678
        %1711 = vst.msk [vmem:[%s394 + $0x90] sm:$0xff] %vm1004, %v1679
        %1712 = vst.msk [vmem:[%s394 + $0x98] sm:$0xff] %vm1004, %v1680
        %1713 = vst.msk [vmem:[%s394 + $0xa0] sm:$0xff] %vm1004, %v1681
        %1714 = vst.msk [vmem:[%s394 + $0xa8] sm:$0xff] %vm1004, %v1682
        %1715 = vst.msk [vmem:[%s394 + $0xb0] sm:$0xff] %vm1004, %v1683
        %1716 = vst.msk [vmem:[%s394 + $0xb8] sm:$0xff] %vm1004, %v1684
        %1717 = vst.msk [vmem:[%s394 + $0xc0] sm:$0xff] %vm1004, %v1685
        %1718 = vst.msk [vmem:[%s394 + $0xc8] sm:$0xff] %vm1004, %v1686
        %1719 = vst.msk [vmem:[%s394 + $0xd0] sm:$0xff] %vm1004, %v1687
        %1720 = vst.msk [vmem:[%s394 + $0xd8] sm:$0xff] %vm1004, %v1688
        %1721 = vst.msk [vmem:[%s394 + $0xe0] sm:$0xff] %vm1004, %v1689
        %1722 = vst.msk [vmem:[%s394 + $0xe8] sm:$0xff] %vm1004, %v1690
        %1723 = vst.msk [vmem:[%s394 + $0xf0] sm:$0xff] %vm1004, %v1691
        %1724 = vst.msk [vmem:[%s394 + $0xf8] sm:$0xff] %vm1004, %v1692
        %v1725 = vld [vmem:[%s403] sm:$0xff]
        %v1726 = vld [vmem:[%s403 + $0x8] sm:$0xff]
        %v1727 = vld [vmem:[%s403 + $0x10] sm:$0xff]
        %v1728 = vld [vmem:[%s403 + $0x18] sm:$0xff]
        %v1729 = vld [vmem:[%s403 + $0x20] sm:$0xff]
        %v1730 = vld [vmem:[%s403 + $0x28] sm:$0xff]
        %v1731 = vld [vmem:[%s403 + $0x30] sm:$0xff]
        %v1732 = vld [vmem:[%s403 + $0x38] sm:$0xff]
        %v1733 = vld [vmem:[%s403 + $0x40] sm:$0xff]
        %v1734 = vld [vmem:[%s403 + $0x48] sm:$0xff]
        %v1735 = vld [vmem:[%s403 + $0x50] sm:$0xff]
        %v1736 = vld [vmem:[%s403 + $0x58] sm:$0xff]
        %v1737 = vld [vmem:[%s403 + $0x60] sm:$0xff]
        %v1738 = vld [vmem:[%s403 + $0x68] sm:$0xff]
        %v1739 = vld [vmem:[%s403 + $0x70] sm:$0xff]
        %v1740 = vld [vmem:[%s403 + $0x78] sm:$0xff]
        %v1741 = vld [vmem:[%s403 + $0x80] sm:$0xff]
        %v1742 = vld [vmem:[%s403 + $0x88] sm:$0xff]
        %v1743 = vld [vmem:[%s403 + $0x90] sm:$0xff]
        %v1744 = vld [vmem:[%s403 + $0x98] sm:$0xff]
        %v1745 = vld [vmem:[%s403 + $0xa0] sm:$0xff]
        %v1746 = vld [vmem:[%s403 + $0xa8] sm:$0xff]
        %v1747 = vld [vmem:[%s403 + $0xb0] sm:$0xff]
        %v1748 = vld [vmem:[%s403 + $0xb8] sm:$0xff]
        %v1749 = vld [vmem:[%s403 + $0xc0] sm:$0xff]
        %v1750 = vld [vmem:[%s403 + $0xc8] sm:$0xff]
        %v1751 = vld [vmem:[%s403 + $0xd0] sm:$0xff]
        %v1752 = vld [vmem:[%s403 + $0xd8] sm:$0xff]
        %v1753 = vld [vmem:[%s403 + $0xe0] sm:$0xff]
        %v1754 = vld [vmem:[%s403 + $0xe8] sm:$0xff]
        %v1755 = vld [vmem:[%s403 + $0xf0] sm:$0xff]
        %v1756 = vld [vmem:[%s403 + $0xf8] sm:$0xff]
        %v1757 = vunpack.c.l.bf16 %v1387
        %v1758 = vunpack.c.h.bf16 %v1387
        %v1759 = vunpack.c.l.bf16 %v1388
        %v1760 = vunpack.c.h.bf16 %v1388
        %v1761 = vunpack.c.l.bf16 %v1389
        %v1762 = vunpack.c.h.bf16 %v1389
        %v1763 = vunpack.c.l.bf16 %v1390
        %v1764 = vunpack.c.h.bf16 %v1390
        %v1765 = vunpack.c.l.bf16 %v1391
        %v1766 = vunpack.c.h.bf16 %v1391
        %v1767 = vunpack.c.l.bf16 %v1392
        %v1768 = vunpack.c.h.bf16 %v1392
        %v1769 = vunpack.c.l.bf16 %v1393
        %v1770 = vunpack.c.h.bf16 %v1393
        %v1771 = vunpack.c.l.bf16 %v1394
        %v1772 = vunpack.c.h.bf16 %v1394
        %v1773 = vunpack.c.l.bf16 %v1395
        %v1774 = vunpack.c.h.bf16 %v1395
        %v1775 = vunpack.c.l.bf16 %v1396
        %v1776 = vunpack.c.h.bf16 %v1396
        %v1777 = vunpack.c.l.bf16 %v1397
        %v1778 = vunpack.c.h.bf16 %v1397
        %v1779 = vunpack.c.l.bf16 %v1398
        %v1780 = vunpack.c.h.bf16 %v1398
        %v1781 = vunpack.c.l.bf16 %v1399
        %v1782 = vunpack.c.h.bf16 %v1399
        %v1783 = vunpack.c.l.bf16 %v1400
        %v1784 = vunpack.c.h.bf16 %v1400
        %v1785 = vunpack.c.l.bf16 %v1401
        %v1786 = vunpack.c.h.bf16 %v1401
        %v1787 = vunpack.c.l.bf16 %v1402
        %v1788 = vunpack.c.h.bf16 %v1402
        %1789 = vadd.xlane.f32.xlu0 %v1757
        %v1790 = vpop.xlane.xlu0 %1789
        %1791 = vadd.xlane.f32.xlu0 %v1758
        %v1792 = vpop.xlane.xlu0 %1791
        %1793 = vadd.xlane.f32.xlu0 %v1759
        %v1794 = vpop.xlane.xlu0 %1793
        %1795 = vadd.xlane.f32.xlu0 %v1760
        %v1796 = vpop.xlane.xlu0 %1795
        %1797 = vadd.xlane.f32.xlu0 %v1761
        %v1798 = vpop.xlane.xlu0 %1797
        %1799 = vadd.xlane.f32.xlu0 %v1762
        %v1800 = vpop.xlane.xlu0 %1799
        %1801 = vadd.xlane.f32.xlu0 %v1763
        %v1802 = vpop.xlane.xlu0 %1801
        %1803 = vadd.xlane.f32.xlu0 %v1764
        %v1804 = vpop.xlane.xlu0 %1803
        %1805 = vadd.xlane.f32.xlu0 %v1765
        %v1806 = vpop.xlane.xlu0 %1805
        %1807 = vadd.xlane.f32.xlu0 %v1766
        %v1808 = vpop.xlane.xlu0 %1807
        %1809 = vadd.xlane.f32.xlu0 %v1767
        %v1810 = vpop.xlane.xlu0 %1809
        %1811 = vadd.xlane.f32.xlu0 %v1768
        %v1812 = vpop.xlane.xlu0 %1811
        %1813 = vadd.xlane.f32.xlu0 %v1769
        %v1814 = vpop.xlane.xlu0 %1813
        %1815 = vadd.xlane.f32.xlu0 %v1770
        %v1816 = vpop.xlane.xlu0 %1815
        %1817 = vadd.xlane.f32.xlu0 %v1771
        %v1818 = vpop.xlane.xlu0 %1817
        %1819 = vadd.xlane.f32.xlu0 %v1772
        %v1820 = vpop.xlane.xlu0 %1819
        %1821 = vadd.xlane.f32.xlu0 %v1773
        %v1822 = vpop.xlane.xlu0 %1821
        %1823 = vadd.xlane.f32.xlu0 %v1774
        %v1824 = vpop.xlane.xlu0 %1823
        %1825 = vadd.xlane.f32.xlu0 %v1775
        %v1826 = vpop.xlane.xlu0 %1825
        %1827 = vadd.xlane.f32.xlu0 %v1776
        %v1828 = vpop.xlane.xlu0 %1827
        %1829 = vadd.xlane.f32.xlu0 %v1777
        %v1830 = vpop.xlane.xlu0 %1829
        %1831 = vadd.xlane.f32.xlu0 %v1778
        %v1832 = vpop.xlane.xlu0 %1831
        %1833 = vadd.xlane.f32.xlu0 %v1779
        %v1834 = vpop.xlane.xlu0 %1833
        %1835 = vadd.xlane.f32.xlu0 %v1780
        %v1836 = vpop.xlane.xlu0 %1835
        %1837 = vadd.xlane.f32.xlu0 %v1781
        %v1838 = vpop.xlane.xlu0 %1837
        %1839 = vadd.xlane.f32.xlu0 %v1782
        %v1840 = vpop.xlane.xlu0 %1839
        %1841 = vadd.xlane.f32.xlu0 %v1783
        %v1842 = vpop.xlane.xlu0 %1841
        %1843 = vadd.xlane.f32.xlu0 %v1784
        %v1844 = vpop.xlane.xlu0 %1843
        %1845 = vadd.xlane.f32.xlu0 %v1785
        %v1846 = vpop.xlane.xlu0 %1845
        %1847 = vadd.xlane.f32.xlu0 %v1786
        %v1848 = vpop.xlane.xlu0 %1847
        %1849 = vadd.xlane.f32.xlu0 %v1787
        %v1850 = vpop.xlane.xlu0 %1849
        %1851 = vadd.xlane.f32.xlu0 %v1788
        %v1852 = vpop.xlane.xlu0 %1851
        %v1853 = vadd.f32 %v1725, %v1790
        %v1854 = vadd.f32 %v1726, %v1792
        %v1855 = vadd.f32 %v1727, %v1794
        %v1856 = vadd.f32 %v1728, %v1796
        %v1857 = vadd.f32 %v1729, %v1798
        %v1858 = vadd.f32 %v1730, %v1800
        %v1859 = vadd.f32 %v1731, %v1802
        %v1860 = vadd.f32 %v1732, %v1804
        %v1861 = vadd.f32 %v1733, %v1806
        %v1862 = vadd.f32 %v1734, %v1808
        %v1863 = vadd.f32 %v1735, %v1810
        %v1864 = vadd.f32 %v1736, %v1812
        %v1865 = vadd.f32 %v1737, %v1814
        %v1866 = vadd.f32 %v1738, %v1816
        %v1867 = vadd.f32 %v1739, %v1818
        %v1868 = vadd.f32 %v1740, %v1820
        %v1869 = vadd.f32 %v1741, %v1822
        %v1870 = vadd.f32 %v1742, %v1824
        %v1871 = vadd.f32 %v1743, %v1826
        %v1872 = vadd.f32 %v1744, %v1828
        %v1873 = vadd.f32 %v1745, %v1830
        %v1874 = vadd.f32 %v1746, %v1832
        %v1875 = vadd.f32 %v1747, %v1834
        %v1876 = vadd.f32 %v1748, %v1836
        %v1877 = vadd.f32 %v1749, %v1838
        %v1878 = vadd.f32 %v1750, %v1840
        %v1879 = vadd.f32 %v1751, %v1842
        %v1880 = vadd.f32 %v1752, %v1844
        %v1881 = vadd.f32 %v1753, %v1846
        %v1882 = vadd.f32 %v1754, %v1848
        %v1883 = vadd.f32 %v1755, %v1850
        %v1884 = vadd.f32 %v1756, %v1852
        %1885 = vst.msk [vmem:[%s403] sm:$0xff] %vm1197, %v1853
        %1886 = vst.msk [vmem:[%s403 + $0x8] sm:$0xff] %vm1197, %v1854
        %1887 = vst.msk [vmem:[%s403 + $0x10] sm:$0xff] %vm1197, %v1855
        %1888 = vst.msk [vmem:[%s403 + $0x18] sm:$0xff] %vm1197, %v1856
        %1889 = vst.msk [vmem:[%s403 + $0x20] sm:$0xff] %vm1197, %v1857
        %1890 = vst.msk [vmem:[%s403 + $0x28] sm:$0xff] %vm1197, %v1858
        %1891 = vst.msk [vmem:[%s403 + $0x30] sm:$0xff] %vm1197, %v1859
        %1892 = vst.msk [vmem:[%s403 + $0x38] sm:$0xff] %vm1197, %v1860
        %1893 = vst.msk [vmem:[%s403 + $0x40] sm:$0xff] %vm1197, %v1861
        %1894 = vst.msk [vmem:[%s403 + $0x48] sm:$0xff] %vm1197, %v1862
        %1895 = vst.msk [vmem:[%s403 + $0x50] sm:$0xff] %vm1197, %v1863
        %1896 = vst.msk [vmem:[%s403 + $0x58] sm:$0xff] %vm1197, %v1864
        %1897 = vst.msk [vmem:[%s403 + $0x60] sm:$0xff] %vm1197, %v1865
        %1898 = vst.msk [vmem:[%s403 + $0x68] sm:$0xff] %vm1197, %v1866
        %1899 = vst.msk [vmem:[%s403 + $0x70] sm:$0xff] %vm1197, %v1867
        %1900 = vst.msk [vmem:[%s403 + $0x78] sm:$0xff] %vm1197, %v1868
        %1901 = vst.msk [vmem:[%s403 + $0x80] sm:$0xff] %vm1197, %v1869
        %1902 = vst.msk [vmem:[%s403 + $0x88] sm:$0xff] %vm1197, %v1870
        %1903 = vst.msk [vmem:[%s403 + $0x90] sm:$0xff] %vm1197, %v1871
        %1904 = vst.msk [vmem:[%s403 + $0x98] sm:$0xff] %vm1197, %v1872
        %1905 = vst.msk [vmem:[%s403 + $0xa0] sm:$0xff] %vm1197, %v1873
        %1906 = vst.msk [vmem:[%s403 + $0xa8] sm:$0xff] %vm1197, %v1874
        %1907 = vst.msk [vmem:[%s403 + $0xb0] sm:$0xff] %vm1197, %v1875
        %1908 = vst.msk [vmem:[%s403 + $0xb8] sm:$0xff] %vm1197, %v1876
        %1909 = vst.msk [vmem:[%s403 + $0xc0] sm:$0xff] %vm1197, %v1877
        %1910 = vst.msk [vmem:[%s403 + $0xc8] sm:$0xff] %vm1197, %v1878
        %1911 = vst.msk [vmem:[%s403 + $0xd0] sm:$0xff] %vm1197, %v1879
        %1912 = vst.msk [vmem:[%s403 + $0xd8] sm:$0xff] %vm1197, %v1880
        %1913 = vst.msk [vmem:[%s403 + $0xe0] sm:$0xff] %vm1197, %v1881
        %1914 = vst.msk [vmem:[%s403 + $0xe8] sm:$0xff] %vm1197, %v1882
        %1915 = vst.msk [vmem:[%s403 + $0xf0] sm:$0xff] %vm1197, %v1883
        %1916 = vst.msk [vmem:[%s403 + $0xf8] sm:$0xff] %vm1197, %v1884
        %p1917 = scmp.lt.s32.totalorder %s23, 1
        %s1918 = scalar_select %p1917, %s23, 1
        %p1919 = scmp.lt.s32.totalorder %s24, 1
        %s1920 = scalar_select %p1919, %s24, 1
        %s1921 = smul.addr %s1920, 32
        %s1922 = smul.addr %s1918, 64
        %s1923 = sadd.s32 %s1921, %s1922
        %s1924 = smul.addr %s1923, 8
        %s1925 = scalar_lea.vmem %s4, %s1924
        %p1926 = scmp.lt.s32.totalorder %s23, 1
        %s1927 = scalar_select %p1926, %s23, 1
        %p1928 = scmp.lt.s32.totalorder %s24, 1
        %s1929 = scalar_select %p1928, %s24, 1
        %s1930 = smul.addr %s1929, 32
        %s1931 = smul.addr %s1927, 64
        %s1932 = sadd.s32 %s1930, %s1931
        %s1933 = smul.addr %s1932, 8
        %s1934 = scalar_lea.vmem %s5, %s1933
        // Predicated region
        $region45: #{tpu_custom_call.1} parent=35 // pred_check
          %p1935 = pneg %p172
        $region46: #{tpu_custom_call.1} parent=35 // pred_check_branch
          %1937 = sbr.rel (%p1935) target = $region48
        $region47: #{tpu_custom_call.1} parent=35 // pred_region
          _
        $region48: #{tpu_custom_call.1} parent=35 // pred_fallthru
          _
        // Predicated region
        $region49: #{tpu_custom_call.1} parent=35 // pred_check
          %p1938 = pneg %p200
        $region50: #{tpu_custom_call.1} parent=35 // pred_check_branch
          %1940 = sbr.rel (%p1938) target = $region52
        $region51: #{tpu_custom_call.1} parent=35 // pred_region
          _
        $region52: #{tpu_custom_call.1} parent=35 // pred_fallthru
          _
      $region36: #{tpu_custom_call.1} parent=5 // pred_fallthru
        _
      %p1941 = scmp.le.s32.totalorder 2, %s13
      // Predicated region
      $region53: #{tpu_custom_call.1} parent=5 // pred_check
        %p1942 = pneg %p1941
      $region54: #{tpu_custom_call.1} parent=5 // pred_check_branch
        %1944 = sbr.rel (%p1942) target = $region56
      $region55: #{tpu_custom_call.1} parent=5 // pred_region
        %s1945 = ssub.s32 %s13, 2
        // Predicated region
        $region57: #{tpu_custom_call.1} parent=55 // pred_check
          %p1946 = pneg %p178
        $region58: #{tpu_custom_call.1} parent=55 // pred_check_branch
          %1948 = sbr.rel (%p1946) target = $region60
        $region59: #{tpu_custom_call.1} parent=55 // pred_region
          %p1949 = scmp.lt.s32.totalorder %s26, 1
          %s1950 = scalar_select %p1949, %s26, 1
          %p1951 = scmp.lt.s32.totalorder %s27, 1
          %s1952 = scalar_select %p1951, %s27, 1
          %s1953 = smul.addr %s1952, 32
          %s1954 = smul.addr %s1950, 64
          %s1955 = sadd.s32 %s1953, %s1954
          %s1956 = smul.addr %s1955, 8
          %s1957 = scalar_lea.vmem %s4, %s1956
        $region60: #{tpu_custom_call.1} parent=55 // pred_fallthru
          _
        // Predicated region
        $region61: #{tpu_custom_call.1} parent=55 // pred_check
          %p1958 = pneg %p206
        $region62: #{tpu_custom_call.1} parent=55 // pred_check_branch
          %1960 = sbr.rel (%p1958) target = $region64
        $region63: #{tpu_custom_call.1} parent=55 // pred_region
          %p1961 = scmp.lt.s32.totalorder %s26, 1
          %s1962 = scalar_select %p1961, %s26, 1
          %p1963 = scmp.lt.s32.totalorder %s27, 1
          %s1964 = scalar_select %p1963, %s27, 1
          %s1965 = smul.addr %s1964, 32
          %s1966 = smul.addr %s1962, 64
          %s1967 = sadd.s32 %s1965, %s1966
          %s1968 = smul.addr %s1967, 8
          %s1969 = scalar_lea.vmem %s5, %s1968
        $region64: #{tpu_custom_call.1} parent=55 // pred_fallthru
          _
      $region56: #{tpu_custom_call.1} parent=5 // pred_fallthru
        _
    $region6: #{tpu_custom_call.1} parent=1 // loop_footer
      %s17 = sadd.s32 1, %s13
    $region7: #{tpu_custom_call.1} parent=1 // loop_footer_branch
      %12 = sbr.rel target = $region3
    $region8: #{tpu_custom_call.1} parent=1 // loop_exit
      _
    %1970 = vsyncpa [#allocation3], 1
    %s1971 = scalar_lea.sflag [#allocation3], 1
    %1972 = vsyncpa %s1971, 1

</llo_original>
